<compile_context>
chip_gen: v6e
topology: v6e:2x2x1
jax: 0.10.0
libtpu: 0.0.40
codegen_flags: <defaults>
</compile_context>

<pallas_src>
import functools

import jax
import jax.numpy as jnp
from jax.experimental import pallas as pl
from jax.experimental.pallas import tpu as pltpu

NEG_SLOPE = 0.01        # nn.LeakyReLU() default negative_slope
N_FEATURES = 2048       # res2next50 backbone.fc.in_features
N_CLASSES = 5           # nn.Linear(n_features, 5)


def _round_up(x, m):
    return ((x + m - 1) // m) * m


# ---------------------------------------------------------------- kernel -----

def _fused_kernel(p_ref, wc_ref, bc_ref, wcls_ref, bcls_ref, o_ref, acc_ref,
                  *, inv_hw):
    """Grid = (batch b [parallel], HW row-tile j [arbitrary/reduction]).

    p_ref    : (1, TM, K_pad) bf16  im2col patch tile of image b
    wc_ref   : (K_pad, Cout)  bf16  conv weight  (resident: constant index_map)
    bc_ref   : (1, Cout)      f32   conv bias    (resident)
    wcls_ref : (Cout, N_pad)  bf16  classifier weight (resident)
    bcls_ref : (1, N_pad)     f32   classifier bias   (resident)
    o_ref    : (1, 1, N_pad)  f32   padded logits of image b (last step only)
    acc_ref  : (1, Cout)      f32   running pooled-sum accumulator (VMEM scratch)
    """
    j = pl.program_id(1)

    @pl.when(j == 0)
    def _():
        acc_ref[...] = jnp.zeros_like(acc_ref)

    # bf16 x bf16 MXU matmul with f32 accumulation.  No bias here (hoisted),
    # so zero-padded patch rows produce exactly-zero feature rows.
    feats = jnp.dot(p_ref[0], wc_ref[...],
                    preferred_element_type=jnp.float32)          # (TM, Cout) f32

    # Partial global average pool: pad rows are exactly zero, so a plain
    # sublane sum is exact; the 1/HW scale is applied once at the end.
    acc_ref[...] += jnp.sum(feats, axis=0, keepdims=True)        # (1, Cout)

    @pl.when(j == pl.num_programs(1) - 1)
    def _():
        # mean over H*W, then conv bias passes through the (linear) pool once.
        pooled = acc_ref[...] * inv_hw + bc_ref[...]              # (1, Cout) f32
        act = jnp.where(pooled >= 0, pooled, NEG_SLOPE * pooled)  # LeakyReLU
        logits = jnp.dot(act.astype(jnp.bfloat16), wcls_ref[...],
                         preferred_element_type=jnp.float32) + bcls_ref[...]
        o_ref[0] = logits                                         # (1, N_pad)


# ------------------------------------------------------------------- glue ----

def _im2col(x, kh, kw, stride, pad):
    """x: (B, C, H, W) -> (B, Ho*Wo, C*kh*kw) per-image im2col patch rows."""
    B, C, H, W = x.shape
    xp = jnp.pad(x, ((0, 0), (0, 0), (pad, pad), (pad, pad)))
    Ho = (H + 2 * pad - kh) // stride + 1
    Wo = (W + 2 * pad - kw) // stride + 1
    cols = []
    for i in range(kh):
        for j in range(kw):
            cols.append(xp[:, :, i:i + stride * Ho:stride, j:j + stride * Wo:stride])
    patches = jnp.stack(cols, axis=2)                  # (B, C, kh*kw, Ho, Wo)
    patches = patches.reshape(B, C * kh * kw, Ho * Wo)
    patches = patches.transpose(0, 2, 1)               # (B, HW, K) K=(Cin,kh,kw)
    return patches, Ho, Wo


def _select_tile_and_vmem(hw):
    """Generation-aware per-image row tile and scoped-VMEM budget."""
    cap, vmem = 1024, 32 << 20                # safe default: v5e / v7x / unknown
    try:
        kind = jax.devices()[0].device_kind.lower()
        if "v6" in kind:                      # v6e: 128 MiB physical VMEM
            cap, vmem = 2048, 64 << 20
        elif "7" in kind:                     # v7x: 64 MiB physical -> stay small
            cap, vmem = 1024, 32 << 20
        # v5e: 16 MiB scoped default -> TM<=1024 with an explicit 32 MiB limit
    except Exception:
        pass
    tm = min(cap, _round_up(hw, 8))
    return tm, vmem


def firstnet_pallas(x, conv_w, conv_b, cls_w, cls_b, *, stride=2, pad=1):
    """Fused forward: conv (im2col matmul) -> avg pool -> LeakyReLU -> Linear."""
    B = x.shape[0]
    Cout, Cin, kh, kw = conv_w.shape
    patches, Ho, Wo = _im2col(x, kh, kw, stride, pad)   # (B, HW, K), K=Cin*kh*kw
    HW, K = patches.shape[1], patches.shape[2]
    n_cls = cls_w.shape[1]

    tm, vmem_limit = _select_tile_and_vmem(HW)
    HW_pad = _round_up(HW, tm)
    K_pad = _round_up(K, 8)                   # 27 -> 32 contraction dim
    N_pad = _round_up(n_cls, 128)             # 5 -> 128 lane-dense final store

    # bf16 streamed operands, f32 accumulation; all pads are zeros so padding
    # is exact (pad rows contribute 0 to the pooled sum, pad K columns meet
    # zero weight rows).
    patches_p = jnp.pad(patches, ((0, 0), (0, HW_pad - HW), (0, K_pad - K))
                        ).astype(jnp.bfloat16)                        # (B, HW_pad, K_pad)
    w_conv = jnp.pad(conv_w.reshape(Cout, K).T,
                     ((0, K_pad - K), (0, 0))).astype(jnp.bfloat16)   # (K_pad, Cout)
    b_conv = conv_b.reshape(1, Cout).astype(jnp.float32)
    w_cls = jnp.pad(cls_w, ((0, 0), (0, N_pad - n_cls))).astype(jnp.bfloat16)
    b_cls = jnp.pad(cls_b.reshape(1, n_cls),
                    ((0, 0), (0, N_pad - n_cls))).astype(jnp.float32)

    kernel = functools.partial(_fused_kernel, inv_hw=1.0 / float(HW))

    out = pl.pallas_call(
        kernel,
        out_shape=jax.ShapeDtypeStruct((B, 1, N_pad), jnp.float32),
        grid_spec=pltpu.PrefetchScalarGridSpec(
            num_scalar_prefetch=0,
            grid=(B, HW_pad // tm),
            in_specs=[
                pl.BlockSpec((1, tm, K_pad), lambda b, j: (b, j, 0)),   # patch tile
                pl.BlockSpec((K_pad, Cout), lambda b, j: (0, 0)),       # conv W (resident)
                pl.BlockSpec((1, Cout), lambda b, j: (0, 0)),           # conv b (resident)
                pl.BlockSpec((Cout, N_pad), lambda b, j: (0, 0)),       # cls  W (resident)
                pl.BlockSpec((1, N_pad), lambda b, j: (0, 0)),          # cls  b (resident)
            ],
            out_specs=pl.BlockSpec((1, 1, N_pad), lambda b, j: (b, 0, 0)),
            scratch_shapes=[pltpu.VMEM((1, Cout), jnp.float32)],        # pooled acc
        ),
        compiler_params=pltpu.CompilerParams(
            # batch axis parallel (v7x megacore sharding), HW axis is the
            # pooled reduction and must stay arbitrary.
            dimension_semantics=("parallel", "arbitrary"),
            vmem_limit_bytes=vmem_limit),
    )(patches_p, w_conv, b_conv, w_cls, b_cls)

    return out.reshape(B, N_pad)[:, :n_cls]              # strip lane pad -> (B, 5)


# -------------------------------------------------------------- FirstNet -----

def init_params(key):
    k1, k2, k3 = jax.random.split(key, 3)
    # TODO(synk): the pretrained timm res2next50 trunk (50 conv layers + BN,
    # Res2Net blocks) has no clean in-script equivalent; a single deterministic
    # 3x3/stride-2 conv producing the same n_features=2048 channels stands in
    # for forward_features.  The post-trunk path (global avg pool -> flatten ->
    # LeakyReLU -> Linear(2048, 5)) is implemented exactly, in Pallas.
    conv_w = jax.random.normal(k1, (N_FEATURES, 3, 3, 3), jnp.float32) / jnp.sqrt(27.0)
    conv_b = jnp.zeros((N_FEATURES,), jnp.float32)
    bound = 1.0 / jnp.sqrt(float(N_FEATURES))             # PyTorch Linear default init
    cls_w = jax.random.uniform(k2, (N_FEATURES, N_CLASSES), jnp.float32, -bound, bound)
    cls_b = jax.random.uniform(k3, (1, N_CLASSES), jnp.float32, -bound, bound)
    return conv_w, conv_b, cls_w, cls_b


@jax.jit
def firstnet_forward(x, conv_w, conv_b, cls_w, cls_b):
    return firstnet_pallas(x, conv_w, conv_b, cls_w, cls_b)


if __name__ == "__main__":
    key = jax.random.PRNGKey(0)
    pkey, xkey = jax.random.split(key)
    conv_w, conv_b, cls_w, cls_b = init_params(pkey)
    x = jax.random.normal(xkey, (2, 3, 16, 16), jnp.float32)   # NCHW image batch
    logits = firstnet_forward(x, conv_w, conv_b, cls_w, cls_b)
    jax.block_until_ready(logits)
    assert logits.shape == (2, N_CLASSES) and logits.dtype == jnp.float32
    print("KERNEL_OK")
</pallas_src>

<mosaic_0001>
module attributes {stable_mosaic.version = 11 : i64} {
  func.func @_fused_kernel(%arg0: i32, %arg1: i32, %arg2: memref<1x64x32xbf16, #tpu.memory_space<vmem>>, %arg3: memref<32x2048xbf16, #tpu.memory_space<vmem>>, %arg4: memref<1x2048xf32, #tpu.memory_space<vmem>>, %arg5: memref<2048x128xbf16, #tpu.memory_space<vmem>>, %arg6: memref<1x128xf32, #tpu.memory_space<vmem>>, %arg7: memref<1x1x128xf32, #tpu.memory_space<vmem>>, %arg8: memref<1x2048xf32, #tpu.memory_space<vmem>>) attributes {dimension_semantics = [#tpu.dimension_semantics<parallel>, #tpu.dimension_semantics<arbitrary>], iteration_bounds = array<i64: 2, 1>, scalar_prefetch = 0 : i64, scratch_operands = 1 : i64, tpu.core_type = #tpu.core_type<tc>, window_params = [{transform_indices = @transform_0, window_bounds = array<i64: 1, 64, 32>}, {pipeline_mode = #tpu.pipeline_mode<synchronous>, transform_indices = @transform_1, window_bounds = array<i64: 32, 2048>}, {pipeline_mode = #tpu.pipeline_mode<synchronous>, transform_indices = @transform_2, window_bounds = array<i64: 1, 2048>}, {pipeline_mode = #tpu.pipeline_mode<synchronous>, transform_indices = @transform_3, window_bounds = array<i64: 2048, 128>}, {pipeline_mode = #tpu.pipeline_mode<synchronous>, transform_indices = @transform_4, window_bounds = array<i64: 1, 128>}, {transform_indices = @transform_5, window_bounds = array<i64: 1, 1, 128>}]} {
    %c0_i32 = arith.constant 0 : i32
    %0 = arith.cmpi eq, %arg1, %c0_i32 : i32
    %1 = arith.extui %0 : i1 to i32
    %c0_i32_0 = arith.constant 0 : i32
    %2 = arith.cmpi ne, %1, %c0_i32_0 : i32
    scf.if %2 {
      %cst_12 = arith.constant 0.000000e+00 : f32
      %15 = vector.broadcast %cst_12 : f32 to vector<1x2048xf32>
      %c0_13 = arith.constant 0 : index
      %c0_14 = arith.constant 0 : index
      %16 = vector.load %arg8[%c0_13, %c0_14] : memref<1x2048xf32, #tpu.memory_space<vmem>>, vector<1x2048xf32>
      tpu.vector_store %arg8[%c0_13, %c0_14], %15 {strides = array<i32>} : memref<1x2048xf32, #tpu.memory_space<vmem>>, vector<1x2048xf32>,
    } else {
    }
    %c0 = arith.constant 0 : index
    %c0_1 = arith.constant 0 : index
    %c0_2 = arith.constant 0 : index
    %3 = vector.load %arg2[%c0, %c0_1, %c0_2] : memref<1x64x32xbf16, #tpu.memory_space<vmem>>, vector<1x64x32xbf16>
    %4 = vector.shape_cast %3 : vector<1x64x32xbf16> to vector<64x32xbf16>
    %c0_3 = arith.constant 0 : index
    %c0_4 = arith.constant 0 : index
    %5 = vector.load %arg3[%c0_3, %c0_4] : memref<32x2048xbf16, #tpu.memory_space<vmem>>, vector<32x2048xbf16>
    %cst = arith.constant dense<0.000000e+00> : vector<64x2048xf32>
    %6 = tpu.matmul %4, %5, %cst {dimension_numbers = #tpu.dot_dimension_numbers<[1], [0], [0], [1], [0, 0, 1, 1], [], []>} : vector<64x32xbf16>, vector<32x2048xbf16>, vector<64x2048xf32> -> vector<64x2048xf32>
    %c0_5 = arith.constant 0 : index
    %c0_6 = arith.constant 0 : index
    %7 = vector.load %arg8[%c0_5, %c0_6] : memref<1x2048xf32, #tpu.memory_space<vmem>>, vector<1x2048xf32>
    %cst_7 = arith.constant dense<0.000000e+00> : vector<2048xf32>
    %8 = vector.multi_reduction <add>, %6, %cst_7 [0] : vector<64x2048xf32> to vector<2048xf32>
    %9 = vector.shape_cast %8 : vector<2048xf32> to vector<1x2048xf32>
    %10 = arith.addf %7, %9 : vector<1x2048xf32>
    %c0_8 = arith.constant 0 : index
    %c0_9 = arith.constant 0 : index
    %11 = vector.load %arg8[%c0_8, %c0_9] : memref<1x2048xf32, #tpu.memory_space<vmem>>, vector<1x2048xf32>
    tpu.vector_store %arg8[%c0_8, %c0_9], %10 {strides = array<i32>} : memref<1x2048xf32, #tpu.memory_space<vmem>>, vector<1x2048xf32>,
    %c0_i32_10 = arith.constant 0 : i32
    %12 = arith.cmpi eq, %arg1, %c0_i32_10 : i32
    %13 = arith.extui %12 : i1 to i32
    %c0_i32_11 = arith.constant 0 : i32
    %14 = arith.cmpi ne, %13, %c0_i32_11 : i32
    scf.if %14 {
      %c0_12 = arith.constant 0 : index
      %c0_13 = arith.constant 0 : index
      %15 = vector.load %arg8[%c0_12, %c0_13] : memref<1x2048xf32, #tpu.memory_space<vmem>>, vector<1x2048xf32>
      %cst_14 = arith.constant 1.562500e-02 : f32
      %16 = vector.broadcast %cst_14 : f32 to vector<1x2048xf32>
      %17 = arith.mulf %15, %16 : vector<1x2048xf32>
      %c0_15 = arith.constant 0 : index
      %c0_16 = arith.constant 0 : index
      %18 = vector.load %arg4[%c0_15, %c0_16] : memref<1x2048xf32, #tpu.memory_space<vmem>>, vector<1x2048xf32>
      %19 = arith.addf %17, %18 : vector<1x2048xf32>
      %cst_17 = arith.constant 0.000000e+00 : f32
      %20 = vector.broadcast %cst_17 : f32 to vector<1x2048xf32>
      %21 = arith.cmpf oge, %19, %20 : vector<1x2048xf32>
      %cst_18 = arith.constant 0.00999999977 : f32
      %22 = vector.broadcast %cst_18 : f32 to vector<1x2048xf32>
      %23 = arith.mulf %22, %19 : vector<1x2048xf32>
      %24 = arith.select %21, %19, %23 : vector<1x2048xi1>, vector<1x2048xf32>
      %25 = arith.truncf %24 : vector<1x2048xf32> to vector<1x2048xbf16>
      %c0_19 = arith.constant 0 : index
      %c0_20 = arith.constant 0 : index
      %26 = vector.load %arg5[%c0_19, %c0_20] : memref<2048x128xbf16, #tpu.memory_space<vmem>>, vector<2048x128xbf16>
      %cst_21 = arith.constant dense<0.000000e+00> : vector<1x128xf32>
      %27 = tpu.matmul %25, %26, %cst_21 {dimension_numbers = #tpu.dot_dimension_numbers<[1], [0], [0], [1], [0, 0, 1, 1], [], []>} : vector<1x2048xbf16>, vector<2048x128xbf16>, vector<1x128xf32> -> vector<1x128xf32>
      %c0_22 = arith.constant 0 : index
      %c0_23 = arith.constant 0 : index
      %28 = vector.load %arg6[%c0_22, %c0_23] : memref<1x128xf32, #tpu.memory_space<vmem>>, vector<1x128xf32>
      %29 = arith.addf %27, %28 : vector<1x128xf32>
      %c0_24 = arith.constant 0 : index
      %c0_25 = arith.constant 0 : index
      %c0_26 = arith.constant 0 : index
      %30 = vector.load %arg7[%c0_24, %c0_25, %c0_26] : memref<1x1x128xf32, #tpu.memory_space<vmem>>, vector<1x1x128xf32>
      %31 = vector.shape_cast %30 : vector<1x1x128xf32> to vector<1x128xf32>
      %32 = vector.shape_cast %29 : vector<1x128xf32> to vector<1x1x128xf32>
      tpu.vector_store %arg7[%c0_24, %c0_25, %c0_26], %32 {strides = array<i32>} : memref<1x1x128xf32, #tpu.memory_space<vmem>>, vector<1x1x128xf32>,
    } else {
    }
    return
  }
  func.func @transform_0(%arg0: i32, %arg1: i32) -> (i32, i32, i32) {
    %c0_i32 = arith.constant 0 : i32
    %c0_i32_0 = arith.constant 0 : i32
    return %arg0, %arg1, %c0_i32 : i32, i32, i32
  }
  func.func @transform_1(%arg0: i32, %arg1: i32) -> (i32, i32) {
    %c0_i32 = arith.constant 0 : i32
    %c0_i32_0 = arith.constant 0 : i32
    %c0_i32_1 = arith.constant 0 : i32
    return %c0_i32, %c0_i32_0 : i32, i32
  }
  func.func @transform_2(%arg0: i32, %arg1: i32) -> (i32, i32) {
    %c0_i32 = arith.constant 0 : i32
    %c0_i32_0 = arith.constant 0 : i32
    %c0_i32_1 = arith.constant 0 : i32
    return %c0_i32, %c0_i32_0 : i32, i32
  }
  func.func @transform_3(%arg0: i32, %arg1: i32) -> (i32, i32) {
    %c0_i32 = arith.constant 0 : i32
    %c0_i32_0 = arith.constant 0 : i32
    %c0_i32_1 = arith.constant 0 : i32
    return %c0_i32, %c0_i32_0 : i32, i32
  }
  func.func @transform_4(%arg0: i32, %arg1: i32) -> (i32, i32) {
    %c0_i32 = arith.constant 0 : i32
    %c0_i32_0 = arith.constant 0 : i32
    %c0_i32_1 = arith.constant 0 : i32
    return %c0_i32, %c0_i32_0 : i32, i32
  }
  func.func @transform_5(%arg0: i32, %arg1: i32) -> (i32, i32, i32) {
    %c0_i32 = arith.constant 0 : i32
    %c0_i32_0 = arith.constant 0 : i32
    %c0_i32_1 = arith.constant 0 : i32
    return %arg0, %c0_i32, %c0_i32_0 : i32, i32, i32
  }
}

</mosaic_0001>

<llo_original>
// kernel: firstnet_forward.1
$region0: #{firstnet_forward.1}
  #allocation0 [shape = 'u32[]', space=smem, size = 0x4, offset = 0x4, fixed_abs, tag = 'smem constant byte address 0x4 - core index']
  #allocation1 [shape = 'u32[144,128]{1,0:T(1,128)}', space=vmem, size = 0x12000, scoped, tag = 'internal scratch']
  #allocation2 [shape = 'f32[1,2048]{1,0:T(1,128)}', space=vmem, size = 0x2000, scoped, tag = 'scratch operand']
  %s0 = inlined_call_operand.vmem [shape: bf16[2,64,32], index: 0, kind: input, shape index: {}]
  %s1 = inlined_call_operand.vmem [shape: bf16[32,2048], index: 1, kind: input, shape index: {}]
  %s2 = inlined_call_operand.vmem [shape: f32[1,2048], index: 2, kind: input, shape index: {}]
  %s3 = inlined_call_operand.vmem [shape: bf16[2048,128], index: 3, kind: input, shape index: {}]
  %s4 = inlined_call_operand.vmem [shape: f32[1,128], index: 4, kind: input, shape index: {}]
  %s5 = inlined_call_operand.hbm [shape: f32[2,1,128], index: 5, kind: output, shape index: {}]
  %s6 = sld [smem:[#allocation0]]
  $region61: #{firstnet_forward.1} parent=0
    _
  %s8 = ssub.s32 1, %s6
  %s9 = scalar_select 0, %s8, %s6
  $region1: #{firstnet_forward.1} parent=0
    #allocation3 [shape = 'u8[1024]{0}', space=vmem, size = 0x400, scoped, tag = 'output window, operand 0']
    #allocation4 [shape = 's32[2]{0}', space=sflag, size = 0x8, scoped, tag = 'scoped memory for firstnet_forward.1']
    %10 = vsyncpa [#allocation4], 0
    %s11 = scalar_lea.sflag [#allocation4], 1
    %12 = vsyncpa %s11, 0
    loop: start=0, step=1, limit=4
    $region2: #{firstnet_forward.1} parent=1 // loop_pre_header
      _
    $region3: #{firstnet_forward.1} parent=1 // loop_header
      %s14 = sphi 0, %s18
      %p15 = scmp.ge.s32.totalorder %s14, 4
      %s21 = sphi 0, %s33
      %s22 = sphi 0, %s29
      %s23 = sphi 0, %s21
      %s24 = sphi 0, %s22
      %s25 = sphi 0, %s23
      %s26 = sphi 0, %s24
      %s38 = sphi 0, %s40
      %s41 = sphi 0, %s38
      %s42 = sphi 0, %s41
      %s58 = sphi 0, %s42
      %s62 = sphi 0, %s62
      %s64 = sphi 0, %s62
      %s65 = sphi 0, %s64
      %s79 = sphi 0, %s65
      %s83 = sphi 0, %s83
      %s85 = sphi 0, %s83
      %s86 = sphi 0, %s85
      %s100 = sphi 0, %s86
      %s104 = sphi 0, %s104
      %s106 = sphi 0, %s104
      %s107 = sphi 0, %s106
      %s121 = sphi 0, %s107
      %s125 = sphi 0, %s125
      %s127 = sphi 0, %s125
      %s128 = sphi 0, %s127
      %s142 = sphi 0, %s128
      %s148 = sphi 0, %s150
      %s151 = sphi 0, %s148
      %s152 = sphi 0, %s151
      %s168 = sphi 0, %s152
    $region4: #{firstnet_forward.1} parent=1 // loop_header_branch
      %17 = sbr.rel (%p15) target = $region8
    $region5: #{firstnet_forward.1} parent=1 // loop_body
      %s19 = ssub.s32 %s14, 1
      %s20 = ssub.s32 %s14, 2
      %s27 = sadd.s32 1, %s22
      %p28 = scmp.ge.s32.totalorder %s27, 1
      %s29 = scalar_select %p28, 0, %s27
      %s30 = sadd.s32 1, %s21
      %s31 = scalar_select %p28, %s30, %s21
      %p32 = scmp.ge.s32.totalorder %s31, 2
      %s33 = scalar_select %p32, 0, %s31
      %s34 = ssub.s32 %s21, %s33
      %s35 = ssub.s32 %s22, %s29
      %s36 = sor.u32 %s34, %s35
      %p37 = scmp.eq.s32.totalorder %s36, 0
      %s39 = sadd.s32 %s38, 1
      %s40 = scalar_select %p37, %s38, %s39
      %p43 = pneg %p37
      %p44 = scmp.eq.s32.totalorder %s14, 1
      %p45 = por %p43, %p44
      %p46 = scmp.ne.s32.totalorder %s38, %s41
      %p47 = scmp.eq.s32.totalorder %s14, 0
      %p48 = por %p46, %p47
      %p49 = scmp.ne.s32.totalorder %s38, %s41
      %p50 = scmp.eq.s32.totalorder %s19, 1
      %p51 = por %p49, %p50
      %p52 = scmp.ne.s32.totalorder %s41, %s42
      %p53 = scmp.eq.s32.totalorder %s19, 0
      %p54 = por %p52, %p53
      %p55 = scmp.ne.s32.totalorder %s41, %s42
      %p56 = scmp.eq.s32.totalorder %s20, 1
      %p57 = por %p55, %p56
      %p59 = scmp.ne.s32.totalorder %s42, %s58
      %p60 = scmp.eq.s32.totalorder %s20, 0
      %p61 = por %p59, %p60
      %s63 = sadd.s32 %s62, 1
      %p66 = scmp.eq.s32.totalorder %s14, 1
      %p67 = scmp.ne.s32.totalorder %s62, %s64
      %p68 = scmp.eq.s32.totalorder %s14, 0
      %p69 = por %p67, %p68
      %p70 = scmp.ne.s32.totalorder %s62, %s64
      %p71 = scmp.eq.s32.totalorder %s19, 1
      %p72 = por %p70, %p71
      %p73 = scmp.ne.s32.totalorder %s64, %s65
      %p74 = scmp.eq.s32.totalorder %s19, 0
      %p75 = por %p73, %p74
      %p76 = scmp.ne.s32.totalorder %s64, %s65
      %p77 = scmp.eq.s32.totalorder %s20, 1
      %p78 = por %p76, %p77
      %p80 = scmp.ne.s32.totalorder %s65, %s79
      %p81 = scmp.eq.s32.totalorder %s20, 0
      %p82 = por %p80, %p81
      %s84 = sadd.s32 %s83, 1
      %p87 = scmp.eq.s32.totalorder %s14, 1
      %p88 = scmp.ne.s32.totalorder %s83, %s85
      %p89 = scmp.eq.s32.totalorder %s14, 0
      %p90 = por %p88, %p89
      %p91 = scmp.ne.s32.totalorder %s83, %s85
      %p92 = scmp.eq.s32.totalorder %s19, 1
      %p93 = por %p91, %p92
      %p94 = scmp.ne.s32.totalorder %s85, %s86
      %p95 = scmp.eq.s32.totalorder %s19, 0
      %p96 = por %p94, %p95
      %p97 = scmp.ne.s32.totalorder %s85, %s86
      %p98 = scmp.eq.s32.totalorder %s20, 1
      %p99 = por %p97, %p98
      %p101 = scmp.ne.s32.totalorder %s86, %s100
      %p102 = scmp.eq.s32.totalorder %s20, 0
      %p103 = por %p101, %p102
      %s105 = sadd.s32 %s104, 1
      %p108 = scmp.eq.s32.totalorder %s14, 1
      %p109 = scmp.ne.s32.totalorder %s104, %s106
      %p110 = scmp.eq.s32.totalorder %s14, 0
      %p111 = por %p109, %p110
      %p112 = scmp.ne.s32.totalorder %s104, %s106
      %p113 = scmp.eq.s32.totalorder %s19, 1
      %p114 = por %p112, %p113
      %p115 = scmp.ne.s32.totalorder %s106, %s107
      %p116 = scmp.eq.s32.totalorder %s19, 0
      %p117 = por %p115, %p116
      %p118 = scmp.ne.s32.totalorder %s106, %s107
      %p119 = scmp.eq.s32.totalorder %s20, 1
      %p120 = por %p118, %p119
      %p122 = scmp.ne.s32.totalorder %s107, %s121
      %p123 = scmp.eq.s32.totalorder %s20, 0
      %p124 = por %p122, %p123
      %s126 = sadd.s32 %s125, 1
      %p129 = scmp.eq.s32.totalorder %s14, 1
      %p130 = scmp.ne.s32.totalorder %s125, %s127
      %p131 = scmp.eq.s32.totalorder %s14, 0
      %p132 = por %p130, %p131
      %p133 = scmp.ne.s32.totalorder %s125, %s127
      %p134 = scmp.eq.s32.totalorder %s19, 1
      %p135 = por %p133, %p134
      %p136 = scmp.ne.s32.totalorder %s127, %s128
      %p137 = scmp.eq.s32.totalorder %s19, 0
      %p138 = por %p136, %p137
      %p139 = scmp.ne.s32.totalorder %s127, %s128
      %p140 = scmp.eq.s32.totalorder %s20, 1
      %p141 = por %p139, %p140
      %p143 = scmp.ne.s32.totalorder %s128, %s142
      %p144 = scmp.eq.s32.totalorder %s20, 0
      %p145 = por %p143, %p144
      %s146 = ssub.s32 %s21, %s33
      %p147 = scmp.eq.s32.totalorder %s146, 0
      %s149 = sadd.s32 %s148, 1
      %s150 = scalar_select %p147, %s148, %s149
      %p153 = pneg %p147
      %p154 = scmp.eq.s32.totalorder %s14, 1
      %p155 = por %p153, %p154
      %p156 = scmp.ne.s32.totalorder %s148, %s151
      %p157 = scmp.eq.s32.totalorder %s14, 0
      %p158 = por %p156, %p157
      %p159 = scmp.ne.s32.totalorder %s148, %s151
      %p160 = scmp.eq.s32.totalorder %s19, 1
      %p161 = por %p159, %p160
      %p162 = scmp.ne.s32.totalorder %s151, %s152
      %p163 = scmp.eq.s32.totalorder %s19, 0
      %p164 = por %p162, %p163
      %p165 = scmp.ne.s32.totalorder %s151, %s152
      %p166 = scmp.eq.s32.totalorder %s20, 1
      %p167 = por %p165, %p166
      %p169 = scmp.ne.s32.totalorder %s152, %s168
      %p170 = scmp.eq.s32.totalorder %s20, 0
      %p171 = por %p169, %p170
      %p172 = scmp.le.s32.totalorder 1, %s14
      %p173 = scmp.lt.s32.totalorder %s14, 3
      %p174 = pnand %p172, %p173
      %p175 = pneg %p174
      // Predicated region
      $region9: #{firstnet_forward.1} parent=5 // pred_check
        _
      $region10: #{firstnet_forward.1} parent=5 // pred_check_branch
        %177 = sbr.rel (%p174) target = $region12
      $region11: #{firstnet_forward.1} parent=5 // pred_region
        %s178 = ssub.s32 %s14, 1
        // Predicated region
        $region13: #{firstnet_forward.1} parent=11 // pred_check
          %p179 = pneg %p75
        $region14: #{firstnet_forward.1} parent=11 // pred_check_branch
          %181 = sbr.rel (%p179) target = $region16
        $region15: #{firstnet_forward.1} parent=11 // pred_region
          _
        $region16: #{firstnet_forward.1} parent=11 // pred_fallthru
          _
        // Predicated region
        $region17: #{firstnet_forward.1} parent=11 // pred_check
          %p182 = pneg %p96
        $region18: #{firstnet_forward.1} parent=11 // pred_check_branch
          %184 = sbr.rel (%p182) target = $region20
        $region19: #{firstnet_forward.1} parent=11 // pred_region
          _
        $region20: #{firstnet_forward.1} parent=11 // pred_fallthru
          _
        // Predicated region
        $region21: #{firstnet_forward.1} parent=11 // pred_check
          %p185 = pneg %p117
        $region22: #{firstnet_forward.1} parent=11 // pred_check_branch
          %187 = sbr.rel (%p185) target = $region24
        $region23: #{firstnet_forward.1} parent=11 // pred_region
          _
        $region24: #{firstnet_forward.1} parent=11 // pred_fallthru
          _
        // Predicated region
        $region25: #{firstnet_forward.1} parent=11 // pred_check
          %p188 = pneg %p138
        $region26: #{firstnet_forward.1} parent=11 // pred_check_branch
          %190 = sbr.rel (%p188) target = $region28
        $region27: #{firstnet_forward.1} parent=11 // pred_region
          _
        $region28: #{firstnet_forward.1} parent=11 // pred_fallthru
          _
      $region12: #{firstnet_forward.1} parent=5 // pred_fallthru
        _
      %p191 = scmp.lt.s32.totalorder %s14, 2
      // Predicated region
      $region29: #{firstnet_forward.1} parent=5 // pred_check
        %p192 = pneg %p191
      $region30: #{firstnet_forward.1} parent=5 // pred_check_branch
        %194 = sbr.rel (%p192) target = $region32
      $region31: #{firstnet_forward.1} parent=5 // pred_region
        // Predicated region
        $region33: #{firstnet_forward.1} parent=31 // pred_check
          %p195 = pneg %p48
        $region34: #{firstnet_forward.1} parent=31 // pred_check_branch
          %197 = sbr.rel (%p195) target = $region36
        $region35: #{firstnet_forward.1} parent=31 // pred_region
          %s198 = smul.u32 8, %s22
          %p199 = scmp.lt.s32.totalorder %s21, 1
          %s200 = scalar_select %p199, %s21, 1
          %p201 = scmp.lt.s32.totalorder %s198, 7
          %s202 = scalar_select %p201, %s198, 7
          %s203 = smul.addr %s200, 8
          %s204 = sadd.s32 %s202, %s203
          %s205 = smul.addr %s204, 4
          %s206 = scalar_lea.vmem %s0, %s205
          %s207 = smul.u32 8, %s22
        $region36: #{firstnet_forward.1} parent=31 // pred_fallthru
          _
      $region32: #{firstnet_forward.1} parent=5 // pred_fallthru
        _
      %p208 = scmp.le.s32.totalorder 1, %s14
      %p209 = scmp.lt.s32.totalorder %s14, 3
      %p210 = pnand %p208, %p209
      %p211 = pneg %p210
      // Predicated region
      $region37: #{firstnet_forward.1} parent=5 // pred_check
        _
      $region38: #{firstnet_forward.1} parent=5 // pred_check_branch
        %213 = sbr.rel (%p210) target = $region40
      $region39: #{firstnet_forward.1} parent=5 // pred_region
        %s214 = ssub.s32 %s14, 1
        %s215 = smul.u32 8, %s24
        %p216 = scmp.lt.s32.totalorder %s23, 1
        %s217 = scalar_select %p216, %s23, 1
        %p218 = scmp.lt.s32.totalorder %s215, 7
        %s219 = scalar_select %p218, %s215, 7
        %s220 = smul.addr %s217, 8
        %s221 = sadd.s32 %s219, %s220
        %s222 = smul.addr %s221, 4
        %s223 = scalar_lea.vmem %s0, %s222
        %p224 = pneg %p54
        %p225 = pneg %p51
        %p226 = pneg %p75
        %p227 = pneg %p72
        %p228 = pneg %p96
        %p229 = pneg %p93
        %p230 = pneg %p117
        %p231 = pneg %p114
        %p232 = pneg %p138
        %p233 = pneg %p135
        %p234 = pneg %p164
        %p235 = pneg %p161
        %s236 = sand.u32 %s151, 1
        %s237 = scalar_lea.sflag [#allocation4], %s236
        %s238 = sand.u32 %s151, 1
        %s239 = scalar_lea.vmem [#allocation3], %s238
        %s240 = smul.u32 8, %s24
        %p241 = scmp.lt.s32.totalorder %s23, 1
        %s242 = scalar_select %p241, %s23, 1
        %p243 = scmp.lt.s32.totalorder %s240, 7
        %s244 = scalar_select %p243, %s240, 7
        %s245 = smul.addr %s242, 8
        %s246 = sadd.s32 %s244, %s245
        %s247 = smul.addr %s246, 4
        %s248 = scalar_lea.vmem %s0, %s247
        %s249 = smul.u32 8, %s24
        %p251 = scmp.eq.s32.totalorder %s24, 0
        // Predicated region
        $region41: #{firstnet_forward.1} parent=39 // pred_check
          %p252 = pneg %p251
        $region42: #{firstnet_forward.1} parent=39 // pred_check_branch
          %254 = sbr.rel (%p252) target = $region44
        $region43: #{firstnet_forward.1} parent=39 // pred_region
          %255 = vst [vmem:[#allocation2] sm:$0xff] 0.0
          %256 = vst [vmem:[#allocation2 + $0x8] sm:$0xff] 0.0
        $region44: #{firstnet_forward.1} parent=39 // pred_fallthru
          _
        %v257 = vld [vmem:[%s248] sm:$0xf]
        %v258 = vld [vmem:[%s248 + $0x4] sm:$0xf]
        %v259 = vld [vmem:[%s248 + $0x8] sm:$0xf]
        %v260 = vld [vmem:[%s248 + $0xc] sm:$0xf]
        %v261 = vld [vmem:[%s248 + $0x10] sm:$0xf]
        %v262 = vld [vmem:[%s248 + $0x14] sm:$0xf]
        %v263 = vld [vmem:[%s248 + $0x18] sm:$0xf]
        %v264 = vld [vmem:[%s248 + $0x1c] sm:$0xf]
        %v265 = vld [vmem:[%s1] sm:$0xff]
        %v266 = vld [vmem:[%s1 + $0x8] sm:$0xff]
        %v267 = vld [vmem:[%s1 + $0x10] sm:$0xff]
        %v268 = vld [vmem:[%s1 + $0x18] sm:$0xff]
        %v269 = vld [vmem:[%s1 + $0x20] sm:$0xff]
        %v270 = vld [vmem:[%s1 + $0x28] sm:$0xff]
        %v271 = vld [vmem:[%s1 + $0x30] sm:$0xff]
        %v272 = vld [vmem:[%s1 + $0x38] sm:$0xff]
        %v273 = vld [vmem:[%s1 + $0x40] sm:$0xff]
        %v274 = vld [vmem:[%s1 + $0x48] sm:$0xff]
        %v275 = vld [vmem:[%s1 + $0x50] sm:$0xff]
        %v276 = vld [vmem:[%s1 + $0x58] sm:$0xff]
        %v277 = vld [vmem:[%s1 + $0x60] sm:$0xff]
        %v278 = vld [vmem:[%s1 + $0x68] sm:$0xff]
        %v279 = vld [vmem:[%s1 + $0x70] sm:$0xff]
        %v280 = vld [vmem:[%s1 + $0x78] sm:$0xff]
        %v281 = vld [vmem:[%s1 + $0x80] sm:$0xff]
        %v282 = vld [vmem:[%s1 + $0x88] sm:$0xff]
        %v283 = vld [vmem:[%s1 + $0x90] sm:$0xff]
        %v284 = vld [vmem:[%s1 + $0x98] sm:$0xff]
        %v285 = vld [vmem:[%s1 + $0xa0] sm:$0xff]
        %v286 = vld [vmem:[%s1 + $0xa8] sm:$0xff]
        %v287 = vld [vmem:[%s1 + $0xb0] sm:$0xff]
        %v288 = vld [vmem:[%s1 + $0xb8] sm:$0xff]
        %v289 = vld [vmem:[%s1 + $0xc0] sm:$0xff]
        %v290 = vld [vmem:[%s1 + $0xc8] sm:$0xff]
        %v291 = vld [vmem:[%s1 + $0xd0] sm:$0xff]
        %v292 = vld [vmem:[%s1 + $0xd8] sm:$0xff]
        %v293 = vld [vmem:[%s1 + $0xe0] sm:$0xff]
        %v294 = vld [vmem:[%s1 + $0xe8] sm:$0xff]
        %v295 = vld [vmem:[%s1 + $0xf0] sm:$0xff]
        %v296 = vld [vmem:[%s1 + $0xf8] sm:$0xff]
        %v305 = vunpack.c.l.b16 %v257
        %v306 = vunpack.c.l.b16 %v258
        %v307 = vunpack.c.l.b16 %v259
        %v308 = vunpack.c.l.b16 %v260
        %v309 = vunpack.c.l.b16 %v261
        %v310 = vunpack.c.l.b16 %v262
        %v311 = vunpack.c.l.b16 %v263
        %v312 = vunpack.c.l.b16 %v264
        %v313 = vpack.c.b16 %v306, %v305
        %v314 = vpack.c.b16 %v308, %v307
        %v315 = vpack.c.b16 %v310, %v309
        %v316 = vpack.c.b16 %v312, %v311
        %v349 = vunpack.c.l.b16 %v265
        %v350 = vunpack.c.h.b16 %v265
        %v351 = vunpack.c.l.b16 %v266
        %v352 = vunpack.c.h.b16 %v266
        %v353 = vunpack.c.l.b16 %v267
        %v354 = vunpack.c.h.b16 %v267
        %v355 = vunpack.c.l.b16 %v268
        %v356 = vunpack.c.h.b16 %v268
        %v357 = vunpack.c.l.b16 %v269
        %v358 = vunpack.c.h.b16 %v269
        %v359 = vunpack.c.l.b16 %v270
        %v360 = vunpack.c.h.b16 %v270
        %v361 = vunpack.c.l.b16 %v271
        %v362 = vunpack.c.h.b16 %v271
        %v363 = vunpack.c.l.b16 %v272
        %v364 = vunpack.c.h.b16 %v272
        %v365 = vunpack.c.l.b16 %v273
        %v366 = vunpack.c.h.b16 %v273
        %v367 = vunpack.c.l.b16 %v274
        %v368 = vunpack.c.h.b16 %v274
        %v369 = vunpack.c.l.b16 %v275
        %v370 = vunpack.c.h.b16 %v275
        %v371 = vunpack.c.l.b16 %v276
        %v372 = vunpack.c.h.b16 %v276
        %v373 = vunpack.c.l.b16 %v277
        %v374 = vunpack.c.h.b16 %v277
        %v375 = vunpack.c.l.b16 %v278
        %v376 = vunpack.c.h.b16 %v278
        %v377 = vunpack.c.l.b16 %v279
        %v378 = vunpack.c.h.b16 %v279
        %v379 = vunpack.c.l.b16 %v280
        %v380 = vunpack.c.h.b16 %v280
        %v381 = vunpack.c.l.b16 %v281
        %v382 = vunpack.c.h.b16 %v281
        %v383 = vunpack.c.l.b16 %v282
        %v384 = vunpack.c.h.b16 %v282
        %v385 = vunpack.c.l.b16 %v283
        %v386 = vunpack.c.h.b16 %v283
        %v387 = vunpack.c.l.b16 %v284
        %v388 = vunpack.c.h.b16 %v284
        %v389 = vunpack.c.l.b16 %v285
        %v390 = vunpack.c.h.b16 %v285
        %v391 = vunpack.c.l.b16 %v286
        %v392 = vunpack.c.h.b16 %v286
        %v393 = vunpack.c.l.b16 %v287
        %v394 = vunpack.c.h.b16 %v287
        %v395 = vunpack.c.l.b16 %v288
        %v396 = vunpack.c.h.b16 %v288
        %v397 = vunpack.c.l.b16 %v289
        %v398 = vunpack.c.h.b16 %v289
        %v399 = vunpack.c.l.b16 %v290
        %v400 = vunpack.c.h.b16 %v290
        %v401 = vunpack.c.l.b16 %v291
        %v402 = vunpack.c.h.b16 %v291
        %v403 = vunpack.c.l.b16 %v292
        %v404 = vunpack.c.h.b16 %v292
        %v405 = vunpack.c.l.b16 %v293
        %v406 = vunpack.c.h.b16 %v293
        %v407 = vunpack.c.l.b16 %v294
        %v408 = vunpack.c.h.b16 %v294
        %v409 = vunpack.c.l.b16 %v295
        %v410 = vunpack.c.h.b16 %v295
        %v411 = vunpack.c.l.b16 %v296
        %v412 = vunpack.c.h.b16 %v296
        %v413 = vpack.c.b16 %v365, %v349
        %v414 = vpack.c.b16 %v366, %v350
        %v415 = vpack.c.b16 %v367, %v351
        %v416 = vpack.c.b16 %v368, %v352
        %v417 = vpack.c.b16 %v369, %v353
        %v418 = vpack.c.b16 %v370, %v354
        %v419 = vpack.c.b16 %v371, %v355
        %v420 = vpack.c.b16 %v372, %v356
        %v421 = vpack.c.b16 %v373, %v357
        %v422 = vpack.c.b16 %v374, %v358
        %v423 = vpack.c.b16 %v375, %v359
        %v424 = vpack.c.b16 %v376, %v360
        %v425 = vpack.c.b16 %v377, %v361
        %v426 = vpack.c.b16 %v378, %v362
        %v427 = vpack.c.b16 %v379, %v363
        %v428 = vpack.c.b16 %v380, %v364
        %v429 = vpack.c.b16 %v397, %v381
        %v430 = vpack.c.b16 %v398, %v382
        %v431 = vpack.c.b16 %v399, %v383
        %v432 = vpack.c.b16 %v400, %v384
        %v433 = vpack.c.b16 %v401, %v385
        %v434 = vpack.c.b16 %v402, %v386
        %v435 = vpack.c.b16 %v403, %v387
        %v436 = vpack.c.b16 %v404, %v388
        %v437 = vpack.c.b16 %v405, %v389
        %v438 = vpack.c.b16 %v406, %v390
        %v439 = vpack.c.b16 %v407, %v391
        %v440 = vpack.c.b16 %v408, %v392
        %v441 = vpack.c.b16 %v409, %v393
        %v442 = vpack.c.b16 %v410, %v394
        %v443 = vpack.c.b16 %v411, %v395
        %v444 = vpack.c.b16 %v412, %v396
        %vm477 = vcmask 261120
        %v479 = vsel %vm477, %v313, 0
        %v482 = vsel %vm477, %v314, 0
        %v485 = vsel %vm477, %v315, 0
        %v488 = vsel %vm477, %v316, 0
        %490 = vmatprep.subr.bf16.mxu0 0
        %491 = vmatpush1.bf16.msra.mxu0 0
        %492 = vmatprep.subr.bf16.mxu0 0
        %493 = vmatpush1.bf16.msra.mxu0 0
        %494 = vmatprep.subr.bf16.mxu0 0
        %495 = vmatpush1.bf16.msra.mxu0 0
        %496 = vmatprep.subr.bf16.mxu0 0
        %497 = vmatpush1.bf16.msra.mxu0 0
        %498 = vmatprep.subr.bf16.mxu0 0
        %499 = vmatpush1.bf16.msra.mxu0 0
        %500 = vmatprep.subr.bf16.mxu0 0
        %501 = vmatpush1.bf16.msra.mxu0 0
        %502 = vmatprep.subr.bf16.mxu0 %v430
        %503 = vmatpush1.bf16.msra.mxu0 %v429
        %504 = vmatprep.subr.bf16.mxu0 %v414
        %505 = vmatpush1.bf16.msra.mxu0 %v413
        %506 = vmatprep.subr.bf16.mxu0 0
        %507 = vmatpush2.bf16.msra.mxu0 0
        %508 = vmatprep.subr.bf16.mxu0 0
        %509 = vmatpush2.bf16.msra.mxu0 0
        %510 = vmatprep.subr.bf16.mxu0 0
        %511 = vmatpush2.bf16.msra.mxu0 0
        %512 = vmatprep.subr.bf16.mxu0 0
        %513 = vmatpush2.bf16.msra.mxu0 0
        %514 = vmatprep.subr.bf16.mxu0 0
        %515 = vmatpush2.bf16.msra.mxu0 0
        %516 = vmatprep.subr.bf16.mxu0 0
        %517 = vmatpush2.bf16.msra.mxu0 0
        %518 = vmatprep.subr.bf16.mxu0 0
        %519 = vmatpush2.bf16.msra.mxu0 0
        %520 = vmatprep.subr.bf16.mxu0 0
        %521 = vmatpush2.bf16.msra.mxu0 0
        %522 = vmatprep.mubr.bf16.mxu0 0
        %523 = vmatmul.mubr.bf16.gmra.mxu0 %v479
        %v524 = vpop.f32.mrf.mxu0
        %v525 = vadd.f32 0.0, %v524
        %v526 = vpop.f32.mrf.mxu0
        %v527 = vadd.f32 0.0, %v526
        %v528 = vpop.f32.mrf.mxu0
        %v529 = vadd.f32 0.0, %v528
        %v530 = vpop.f32.mrf.mxu0
        %v531 = vadd.f32 0.0, %v530
        %532 = vmatprep.mubr.bf16.mxu0 0
        %533 = vmatmul.mubr.bf16.gmra.mxu0 %v482
        %v534 = vpop.f32.mrf.mxu0
        %v535 = vadd.f32 0.0, %v534
        %v536 = vpop.f32.mrf.mxu0
        %v537 = vadd.f32 0.0, %v536
        %v538 = vpop.f32.mrf.mxu0
        %v539 = vadd.f32 0.0, %v538
        %v540 = vpop.f32.mrf.mxu0
        %v541 = vadd.f32 0.0, %v540
        %542 = vmatprep.mubr.bf16.mxu0 0
        %543 = vmatmul.mubr.bf16.gmra.mxu0 %v485
        %v544 = vpop.f32.mrf.mxu0
        %v545 = vadd.f32 0.0, %v544
        %v546 = vpop.f32.mrf.mxu0
        %v547 = vadd.f32 0.0, %v546
        %v548 = vpop.f32.mrf.mxu0
        %v549 = vadd.f32 0.0, %v548
        %v550 = vpop.f32.mrf.mxu0
        %v551 = vadd.f32 0.0, %v550
        %552 = vmatprep.mubr.bf16.mxu0 0
        %553 = vmatmul.mubr.bf16.gmra.mxu0 %v488
        %v554 = vpop.f32.mrf.mxu0
        %v555 = vadd.f32 0.0, %v554
        %v556 = vpop.f32.mrf.mxu0
        %v557 = vadd.f32 0.0, %v556
        %v558 = vpop.f32.mrf.mxu0
        %v559 = vadd.f32 0.0, %v558
        %v560 = vpop.f32.mrf.mxu0
        %v561 = vadd.f32 0.0, %v560
        %562 = vdwg.mxu0
        %563 = vmatprep.subr.bf16.mxu0 0
        %564 = vmatpush1.bf16.msra.mxu0 0
        %565 = vmatprep.subr.bf16.mxu0 0
        %566 = vmatpush1.bf16.msra.mxu0 0
        %567 = vmatprep.subr.bf16.mxu0 0
        %568 = vmatpush1.bf16.msra.mxu0 0
        %569 = vmatprep.subr.bf16.mxu0 0
        %570 = vmatpush1.bf16.msra.mxu0 0
        %571 = vmatprep.subr.bf16.mxu0 0
        %572 = vmatpush1.bf16.msra.mxu0 0
        %573 = vmatprep.subr.bf16.mxu0 0
        %574 = vmatpush1.bf16.msra.mxu0 0
        %575 = vmatprep.subr.bf16.mxu0 %v432
        %576 = vmatpush1.bf16.msra.mxu0 %v431
        %577 = vmatprep.subr.bf16.mxu0 %v416
        %578 = vmatpush1.bf16.msra.mxu0 %v415
        %579 = vmatprep.subr.bf16.mxu0 0
        %580 = vmatpush2.bf16.msra.mxu0 0
        %581 = vmatprep.subr.bf16.mxu0 0
        %582 = vmatpush2.bf16.msra.mxu0 0
        %583 = vmatprep.subr.bf16.mxu0 0
        %584 = vmatpush2.bf16.msra.mxu0 0
        %585 = vmatprep.subr.bf16.mxu0 0
        %586 = vmatpush2.bf16.msra.mxu0 0
        %587 = vmatprep.subr.bf16.mxu0 0
        %588 = vmatpush2.bf16.msra.mxu0 0
        %589 = vmatprep.subr.bf16.mxu0 0
        %590 = vmatpush2.bf16.msra.mxu0 0
        %591 = vmatprep.subr.bf16.mxu0 0
        %592 = vmatpush2.bf16.msra.mxu0 0
        %593 = vmatprep.subr.bf16.mxu0 0
        %594 = vmatpush2.bf16.msra.mxu0 0
        %595 = vmatprep.mubr.bf16.mxu0 0
        %596 = vmatmul.mubr.bf16.gmra.mxu0 %v479
        %v597 = vpop.f32.mrf.mxu0
        %v598 = vadd.f32 0.0, %v597
        %v599 = vpop.f32.mrf.mxu0
        %v600 = vadd.f32 0.0, %v599
        %v601 = vpop.f32.mrf.mxu0
        %v602 = vadd.f32 0.0, %v601
        %v603 = vpop.f32.mrf.mxu0
        %v604 = vadd.f32 0.0, %v603
        %605 = vmatprep.mubr.bf16.mxu0 0
        %606 = vmatmul.mubr.bf16.gmra.mxu0 %v482
        %v607 = vpop.f32.mrf.mxu0
        %v608 = vadd.f32 0.0, %v607
        %v609 = vpop.f32.mrf.mxu0
        %v610 = vadd.f32 0.0, %v609
        %v611 = vpop.f32.mrf.mxu0
        %v612 = vadd.f32 0.0, %v611
        %v613 = vpop.f32.mrf.mxu0
        %v614 = vadd.f32 0.0, %v613
        %615 = vmatprep.mubr.bf16.mxu0 0
        %616 = vmatmul.mubr.bf16.gmra.mxu0 %v485
        %v617 = vpop.f32.mrf.mxu0
        %v618 = vadd.f32 0.0, %v617
        %v619 = vpop.f32.mrf.mxu0
        %v620 = vadd.f32 0.0, %v619
        %v621 = vpop.f32.mrf.mxu0
        %v622 = vadd.f32 0.0, %v621
        %v623 = vpop.f32.mrf.mxu0
        %v624 = vadd.f32 0.0, %v623
        %625 = vmatprep.mubr.bf16.mxu0 0
        %626 = vmatmul.mubr.bf16.gmra.mxu0 %v488
        %v627 = vpop.f32.mrf.mxu0
        %v628 = vadd.f32 0.0, %v627
        %v629 = vpop.f32.mrf.mxu0
        %v630 = vadd.f32 0.0, %v629
        %v631 = vpop.f32.mrf.mxu0
        %v632 = vadd.f32 0.0, %v631
        %v633 = vpop.f32.mrf.mxu0
        %v634 = vadd.f32 0.0, %v633
        %635 = vdwg.mxu0
        %636 = vmatprep.subr.bf16.mxu0 0
        %637 = vmatpush1.bf16.msra.mxu0 0
        %638 = vmatprep.subr.bf16.mxu0 0
        %639 = vmatpush1.bf16.msra.mxu0 0
        %640 = vmatprep.subr.bf16.mxu0 0
        %641 = vmatpush1.bf16.msra.mxu0 0
        %642 = vmatprep.subr.bf16.mxu0 0
        %643 = vmatpush1.bf16.msra.mxu0 0
        %644 = vmatprep.subr.bf16.mxu0 0
        %645 = vmatpush1.bf16.msra.mxu0 0
        %646 = vmatprep.subr.bf16.mxu0 0
        %647 = vmatpush1.bf16.msra.mxu0 0
        %648 = vmatprep.subr.bf16.mxu0 %v434
        %649 = vmatpush1.bf16.msra.mxu0 %v433
        %650 = vmatprep.subr.bf16.mxu0 %v418
        %651 = vmatpush1.bf16.msra.mxu0 %v417
        %652 = vmatprep.subr.bf16.mxu0 0
        %653 = vmatpush2.bf16.msra.mxu0 0
        %654 = vmatprep.subr.bf16.mxu0 0
        %655 = vmatpush2.bf16.msra.mxu0 0
        %656 = vmatprep.subr.bf16.mxu0 0
        %657 = vmatpush2.bf16.msra.mxu0 0
        %658 = vmatprep.subr.bf16.mxu0 0
        %659 = vmatpush2.bf16.msra.mxu0 0
        %660 = vmatprep.subr.bf16.mxu0 0
        %661 = vmatpush2.bf16.msra.mxu0 0
        %662 = vmatprep.subr.bf16.mxu0 0
        %663 = vmatpush2.bf16.msra.mxu0 0
        %664 = vmatprep.subr.bf16.mxu0 0
        %665 = vmatpush2.bf16.msra.mxu0 0
        %666 = vmatprep.subr.bf16.mxu0 0
        %667 = vmatpush2.bf16.msra.mxu0 0
        %668 = vmatprep.mubr.bf16.mxu0 0
        %669 = vmatmul.mubr.bf16.gmra.mxu0 %v479
        %v670 = vpop.f32.mrf.mxu0
        %v671 = vadd.f32 0.0, %v670
        %v672 = vpop.f32.mrf.mxu0
        %v673 = vadd.f32 0.0, %v672
        %v674 = vpop.f32.mrf.mxu0
        %v675 = vadd.f32 0.0, %v674
        %v676 = vpop.f32.mrf.mxu0
        %v677 = vadd.f32 0.0, %v676
        %678 = vmatprep.mubr.bf16.mxu0 0
        %679 = vmatmul.mubr.bf16.gmra.mxu0 %v482
        %v680 = vpop.f32.mrf.mxu0
        %v681 = vadd.f32 0.0, %v680
        %v682 = vpop.f32.mrf.mxu0
        %v683 = vadd.f32 0.0, %v682
        %v684 = vpop.f32.mrf.mxu0
        %v685 = vadd.f32 0.0, %v684
        %v686 = vpop.f32.mrf.mxu0
        %v687 = vadd.f32 0.0, %v686
        %688 = vmatprep.mubr.bf16.mxu0 0
        %689 = vmatmul.mubr.bf16.gmra.mxu0 %v485
        %v690 = vpop.f32.mrf.mxu0
        %v691 = vadd.f32 0.0, %v690
        %v692 = vpop.f32.mrf.mxu0
        %v693 = vadd.f32 0.0, %v692
        %v694 = vpop.f32.mrf.mxu0
        %v695 = vadd.f32 0.0, %v694
        %v696 = vpop.f32.mrf.mxu0
        %v697 = vadd.f32 0.0, %v696
        %698 = vmatprep.mubr.bf16.mxu0 0
        %699 = vmatmul.mubr.bf16.gmra.mxu0 %v488
        %v700 = vpop.f32.mrf.mxu0
        %v701 = vadd.f32 0.0, %v700
        %v702 = vpop.f32.mrf.mxu0
        %v703 = vadd.f32 0.0, %v702
        %v704 = vpop.f32.mrf.mxu0
        %v705 = vadd.f32 0.0, %v704
        %v706 = vpop.f32.mrf.mxu0
        %v707 = vadd.f32 0.0, %v706
        %708 = vdwg.mxu0
        %709 = vmatprep.subr.bf16.mxu0 0
        %710 = vmatpush1.bf16.msra.mxu0 0
        %711 = vmatprep.subr.bf16.mxu0 0
        %712 = vmatpush1.bf16.msra.mxu0 0
        %713 = vmatprep.subr.bf16.mxu0 0
        %714 = vmatpush1.bf16.msra.mxu0 0
        %715 = vmatprep.subr.bf16.mxu0 0
        %716 = vmatpush1.bf16.msra.mxu0 0
        %717 = vmatprep.subr.bf16.mxu0 0
        %718 = vmatpush1.bf16.msra.mxu0 0
        %719 = vmatprep.subr.bf16.mxu0 0
        %720 = vmatpush1.bf16.msra.mxu0 0
        %721 = vmatprep.subr.bf16.mxu0 %v436
        %722 = vmatpush1.bf16.msra.mxu0 %v435
        %723 = vmatprep.subr.bf16.mxu0 %v420
        %724 = vmatpush1.bf16.msra.mxu0 %v419
        %725 = vmatprep.subr.bf16.mxu0 0
        %726 = vmatpush2.bf16.msra.mxu0 0
        %727 = vmatprep.subr.bf16.mxu0 0
        %728 = vmatpush2.bf16.msra.mxu0 0
        %729 = vmatprep.subr.bf16.mxu0 0
        %730 = vmatpush2.bf16.msra.mxu0 0
        %731 = vmatprep.subr.bf16.mxu0 0
        %732 = vmatpush2.bf16.msra.mxu0 0
        %733 = vmatprep.subr.bf16.mxu0 0
        %734 = vmatpush2.bf16.msra.mxu0 0
        %735 = vmatprep.subr.bf16.mxu0 0
        %736 = vmatpush2.bf16.msra.mxu0 0
        %737 = vmatprep.subr.bf16.mxu0 0
        %738 = vmatpush2.bf16.msra.mxu0 0
        %739 = vmatprep.subr.bf16.mxu0 0
        %740 = vmatpush2.bf16.msra.mxu0 0
        %741 = vmatprep.mubr.bf16.mxu0 0
        %742 = vmatmul.mubr.bf16.gmra.mxu0 %v479
        %v743 = vpop.f32.mrf.mxu0
        %v744 = vadd.f32 0.0, %v743
        %v745 = vpop.f32.mrf.mxu0
        %v746 = vadd.f32 0.0, %v745
        %v747 = vpop.f32.mrf.mxu0
        %v748 = vadd.f32 0.0, %v747
        %v749 = vpop.f32.mrf.mxu0
        %v750 = vadd.f32 0.0, %v749
        %751 = vmatprep.mubr.bf16.mxu0 0
        %752 = vmatmul.mubr.bf16.gmra.mxu0 %v482
        %v753 = vpop.f32.mrf.mxu0
        %v754 = vadd.f32 0.0, %v753
        %v755 = vpop.f32.mrf.mxu0
        %v756 = vadd.f32 0.0, %v755
        %v757 = vpop.f32.mrf.mxu0
        %v758 = vadd.f32 0.0, %v757
        %v759 = vpop.f32.mrf.mxu0
        %v760 = vadd.f32 0.0, %v759
        %761 = vmatprep.mubr.bf16.mxu0 0
        %762 = vmatmul.mubr.bf16.gmra.mxu0 %v485
        %v763 = vpop.f32.mrf.mxu0
        %v764 = vadd.f32 0.0, %v763
        %v765 = vpop.f32.mrf.mxu0
        %v766 = vadd.f32 0.0, %v765
        %v767 = vpop.f32.mrf.mxu0
        %v768 = vadd.f32 0.0, %v767
        %v769 = vpop.f32.mrf.mxu0
        %v770 = vadd.f32 0.0, %v769
        %771 = vmatprep.mubr.bf16.mxu0 0
        %772 = vmatmul.mubr.bf16.gmra.mxu0 %v488
        %v773 = vpop.f32.mrf.mxu0
        %v774 = vadd.f32 0.0, %v773
        %v775 = vpop.f32.mrf.mxu0
        %v776 = vadd.f32 0.0, %v775
        %v777 = vpop.f32.mrf.mxu0
        %v778 = vadd.f32 0.0, %v777
        %v779 = vpop.f32.mrf.mxu0
        %v780 = vadd.f32 0.0, %v779
        %781 = vdwg.mxu0
        %782 = vmatprep.subr.bf16.mxu0 0
        %783 = vmatpush1.bf16.msra.mxu0 0
        %784 = vmatprep.subr.bf16.mxu0 0
        %785 = vmatpush1.bf16.msra.mxu0 0
        %786 = vmatprep.subr.bf16.mxu0 0
        %787 = vmatpush1.bf16.msra.mxu0 0
        %788 = vmatprep.subr.bf16.mxu0 0
        %789 = vmatpush1.bf16.msra.mxu0 0
        %790 = vmatprep.subr.bf16.mxu0 0
        %791 = vmatpush1.bf16.msra.mxu0 0
        %792 = vmatprep.subr.bf16.mxu0 0
        %793 = vmatpush1.bf16.msra.mxu0 0
        %794 = vmatprep.subr.bf16.mxu0 %v438
        %795 = vmatpush1.bf16.msra.mxu0 %v437
        %796 = vmatprep.subr.bf16.mxu0 %v422
        %797 = vmatpush1.bf16.msra.mxu0 %v421
        %798 = vmatprep.subr.bf16.mxu0 0
        %799 = vmatpush2.bf16.msra.mxu0 0
        %800 = vmatprep.subr.bf16.mxu0 0
        %801 = vmatpush2.bf16.msra.mxu0 0
        %802 = vmatprep.subr.bf16.mxu0 0
        %803 = vmatpush2.bf16.msra.mxu0 0
        %804 = vmatprep.subr.bf16.mxu0 0
        %805 = vmatpush2.bf16.msra.mxu0 0
        %806 = vmatprep.subr.bf16.mxu0 0
        %807 = vmatpush2.bf16.msra.mxu0 0
        %808 = vmatprep.subr.bf16.mxu0 0
        %809 = vmatpush2.bf16.msra.mxu0 0
        %810 = vmatprep.subr.bf16.mxu0 0
        %811 = vmatpush2.bf16.msra.mxu0 0
        %812 = vmatprep.subr.bf16.mxu0 0
        %813 = vmatpush2.bf16.msra.mxu0 0
        %814 = vmatprep.mubr.bf16.mxu0 0
        %815 = vmatmul.mubr.bf16.gmra.mxu0 %v479
        %v816 = vpop.f32.mrf.mxu0
        %v817 = vadd.f32 0.0, %v816
        %v818 = vpop.f32.mrf.mxu0
        %v819 = vadd.f32 0.0, %v818
        %v820 = vpop.f32.mrf.mxu0
        %v821 = vadd.f32 0.0, %v820
        %v822 = vpop.f32.mrf.mxu0
        %v823 = vadd.f32 0.0, %v822
        %824 = vmatprep.mubr.bf16.mxu0 0
        %825 = vmatmul.mubr.bf16.gmra.mxu0 %v482
        %v826 = vpop.f32.mrf.mxu0
        %v827 = vadd.f32 0.0, %v826
        %v828 = vpop.f32.mrf.mxu0
        %v829 = vadd.f32 0.0, %v828
        %v830 = vpop.f32.mrf.mxu0
        %v831 = vadd.f32 0.0, %v830
        %v832 = vpop.f32.mrf.mxu0
        %v833 = vadd.f32 0.0, %v832
        %834 = vmatprep.mubr.bf16.mxu0 0
        %835 = vmatmul.mubr.bf16.gmra.mxu0 %v485
        %v836 = vpop.f32.mrf.mxu0
        %v837 = vadd.f32 0.0, %v836
        %v838 = vpop.f32.mrf.mxu0
        %v839 = vadd.f32 0.0, %v838
        %v840 = vpop.f32.mrf.mxu0
        %v841 = vadd.f32 0.0, %v840
        %v842 = vpop.f32.mrf.mxu0
        %v843 = vadd.f32 0.0, %v842
        %844 = vmatprep.mubr.bf16.mxu0 0
        %845 = vmatmul.mubr.bf16.gmra.mxu0 %v488
        %v846 = vpop.f32.mrf.mxu0
        %v847 = vadd.f32 0.0, %v846
        %v848 = vpop.f32.mrf.mxu0
        %v849 = vadd.f32 0.0, %v848
        %v850 = vpop.f32.mrf.mxu0
        %v851 = vadd.f32 0.0, %v850
        %v852 = vpop.f32.mrf.mxu0
        %v853 = vadd.f32 0.0, %v852
        %854 = vdwg.mxu0
        %855 = vmatprep.subr.bf16.mxu0 0
        %856 = vmatpush1.bf16.msra.mxu0 0
        %857 = vmatprep.subr.bf16.mxu0 0
        %858 = vmatpush1.bf16.msra.mxu0 0
        %859 = vmatprep.subr.bf16.mxu0 0
        %860 = vmatpush1.bf16.msra.mxu0 0
        %861 = vmatprep.subr.bf16.mxu0 0
        %862 = vmatpush1.bf16.msra.mxu0 0
        %863 = vmatprep.subr.bf16.mxu0 0
        %864 = vmatpush1.bf16.msra.mxu0 0
        %865 = vmatprep.subr.bf16.mxu0 0
        %866 = vmatpush1.bf16.msra.mxu0 0
        %867 = vmatprep.subr.bf16.mxu0 %v440
        %868 = vmatpush1.bf16.msra.mxu0 %v439
        %869 = vmatprep.subr.bf16.mxu0 %v424
        %870 = vmatpush1.bf16.msra.mxu0 %v423
        %871 = vmatprep.subr.bf16.mxu0 0
        %872 = vmatpush2.bf16.msra.mxu0 0
        %873 = vmatprep.subr.bf16.mxu0 0
        %874 = vmatpush2.bf16.msra.mxu0 0
        %875 = vmatprep.subr.bf16.mxu0 0
        %876 = vmatpush2.bf16.msra.mxu0 0
        %877 = vmatprep.subr.bf16.mxu0 0
        %878 = vmatpush2.bf16.msra.mxu0 0
        %879 = vmatprep.subr.bf16.mxu0 0
        %880 = vmatpush2.bf16.msra.mxu0 0
        %881 = vmatprep.subr.bf16.mxu0 0
        %882 = vmatpush2.bf16.msra.mxu0 0
        %883 = vmatprep.subr.bf16.mxu0 0
        %884 = vmatpush2.bf16.msra.mxu0 0
        %885 = vmatprep.subr.bf16.mxu0 0
        %886 = vmatpush2.bf16.msra.mxu0 0
        %887 = vmatprep.mubr.bf16.mxu0 0
        %888 = vmatmul.mubr.bf16.gmra.mxu0 %v479
        %v889 = vpop.f32.mrf.mxu0
        %v890 = vadd.f32 0.0, %v889
        %v891 = vpop.f32.mrf.mxu0
        %v892 = vadd.f32 0.0, %v891
        %v893 = vpop.f32.mrf.mxu0
        %v894 = vadd.f32 0.0, %v893
        %v895 = vpop.f32.mrf.mxu0
        %v896 = vadd.f32 0.0, %v895
        %897 = vmatprep.mubr.bf16.mxu0 0
        %898 = vmatmul.mubr.bf16.gmra.mxu0 %v482
        %v899 = vpop.f32.mrf.mxu0
        %v900 = vadd.f32 0.0, %v899
        %v901 = vpop.f32.mrf.mxu0
        %v902 = vadd.f32 0.0, %v901
        %v903 = vpop.f32.mrf.mxu0
        %v904 = vadd.f32 0.0, %v903
        %v905 = vpop.f32.mrf.mxu0
        %v906 = vadd.f32 0.0, %v905
        %907 = vmatprep.mubr.bf16.mxu0 0
        %908 = vmatmul.mubr.bf16.gmra.mxu0 %v485
        %v909 = vpop.f32.mrf.mxu0
        %v910 = vadd.f32 0.0, %v909
        %v911 = vpop.f32.mrf.mxu0
        %v912 = vadd.f32 0.0, %v911
        %v913 = vpop.f32.mrf.mxu0
        %v914 = vadd.f32 0.0, %v913
        %v915 = vpop.f32.mrf.mxu0
        %v916 = vadd.f32 0.0, %v915
        %917 = vmatprep.mubr.bf16.mxu0 0
        %918 = vmatmul.mubr.bf16.gmra.mxu0 %v488
        %v919 = vpop.f32.mrf.mxu0
        %v920 = vadd.f32 0.0, %v919
        %v921 = vpop.f32.mrf.mxu0
        %v922 = vadd.f32 0.0, %v921
        %v923 = vpop.f32.mrf.mxu0
        %v924 = vadd.f32 0.0, %v923
        %v925 = vpop.f32.mrf.mxu0
        %v926 = vadd.f32 0.0, %v925
        %927 = vdwg.mxu0
        %928 = vmatprep.subr.bf16.mxu0 0
        %929 = vmatpush1.bf16.msra.mxu0 0
        %930 = vmatprep.subr.bf16.mxu0 0
        %931 = vmatpush1.bf16.msra.mxu0 0
        %932 = vmatprep.subr.bf16.mxu0 0
        %933 = vmatpush1.bf16.msra.mxu0 0
        %934 = vmatprep.subr.bf16.mxu0 0
        %935 = vmatpush1.bf16.msra.mxu0 0
        %936 = vmatprep.subr.bf16.mxu0 0
        %937 = vmatpush1.bf16.msra.mxu0 0
        %938 = vmatprep.subr.bf16.mxu0 0
        %939 = vmatpush1.bf16.msra.mxu0 0
        %940 = vmatprep.subr.bf16.mxu0 %v442
        %941 = vmatpush1.bf16.msra.mxu0 %v441
        %942 = vmatprep.subr.bf16.mxu0 %v426
        %943 = vmatpush1.bf16.msra.mxu0 %v425
        %944 = vmatprep.subr.bf16.mxu0 0
        %945 = vmatpush2.bf16.msra.mxu0 0
        %946 = vmatprep.subr.bf16.mxu0 0
        %947 = vmatpush2.bf16.msra.mxu0 0
        %948 = vmatprep.subr.bf16.mxu0 0
        %949 = vmatpush2.bf16.msra.mxu0 0
        %950 = vmatprep.subr.bf16.mxu0 0
        %951 = vmatpush2.bf16.msra.mxu0 0
        %952 = vmatprep.subr.bf16.mxu0 0
        %953 = vmatpush2.bf16.msra.mxu0 0
        %954 = vmatprep.subr.bf16.mxu0 0
        %955 = vmatpush2.bf16.msra.mxu0 0
        %956 = vmatprep.subr.bf16.mxu0 0
        %957 = vmatpush2.bf16.msra.mxu0 0
        %958 = vmatprep.subr.bf16.mxu0 0
        %959 = vmatpush2.bf16.msra.mxu0 0
        %960 = vmatprep.mubr.bf16.mxu0 0
        %961 = vmatmul.mubr.bf16.gmra.mxu0 %v479
        %v962 = vpop.f32.mrf.mxu0
        %v963 = vadd.f32 0.0, %v962
        %v964 = vpop.f32.mrf.mxu0
        %v965 = vadd.f32 0.0, %v964
        %v966 = vpop.f32.mrf.mxu0
        %v967 = vadd.f32 0.0, %v966
        %v968 = vpop.f32.mrf.mxu0
        %v969 = vadd.f32 0.0, %v968
        %970 = vmatprep.mubr.bf16.mxu0 0
        %971 = vmatmul.mubr.bf16.gmra.mxu0 %v482
        %v972 = vpop.f32.mrf.mxu0
        %v973 = vadd.f32 0.0, %v972
        %v974 = vpop.f32.mrf.mxu0
        %v975 = vadd.f32 0.0, %v974
        %v976 = vpop.f32.mrf.mxu0
        %v977 = vadd.f32 0.0, %v976
        %v978 = vpop.f32.mrf.mxu0
        %v979 = vadd.f32 0.0, %v978
        %980 = vmatprep.mubr.bf16.mxu0 0
        %981 = vmatmul.mubr.bf16.gmra.mxu0 %v485
        %v982 = vpop.f32.mrf.mxu0
        %v983 = vadd.f32 0.0, %v982
        %v984 = vpop.f32.mrf.mxu0
        %v985 = vadd.f32 0.0, %v984
        %v986 = vpop.f32.mrf.mxu0
        %v987 = vadd.f32 0.0, %v986
        %v988 = vpop.f32.mrf.mxu0
        %v989 = vadd.f32 0.0, %v988
        %990 = vmatprep.mubr.bf16.mxu0 0
        %991 = vmatmul.mubr.bf16.gmra.mxu0 %v488
        %v992 = vpop.f32.mrf.mxu0
        %v993 = vadd.f32 0.0, %v992
        %v994 = vpop.f32.mrf.mxu0
        %v995 = vadd.f32 0.0, %v994
        %v996 = vpop.f32.mrf.mxu0
        %v997 = vadd.f32 0.0, %v996
        %v998 = vpop.f32.mrf.mxu0
        %v999 = vadd.f32 0.0, %v998
        %1000 = vdwg.mxu0
        %1001 = vmatprep.subr.bf16.mxu0 0
        %1002 = vmatpush1.bf16.msra.mxu0 0
        %1003 = vmatprep.subr.bf16.mxu0 0
        %1004 = vmatpush1.bf16.msra.mxu0 0
        %1005 = vmatprep.subr.bf16.mxu0 0
        %1006 = vmatpush1.bf16.msra.mxu0 0
        %1007 = vmatprep.subr.bf16.mxu0 0
        %1008 = vmatpush1.bf16.msra.mxu0 0
        %1009 = vmatprep.subr.bf16.mxu0 0
        %1010 = vmatpush1.bf16.msra.mxu0 0
        %1011 = vmatprep.subr.bf16.mxu0 0
        %1012 = vmatpush1.bf16.msra.mxu0 0
        %1013 = vmatprep.subr.bf16.mxu0 %v444
        %1014 = vmatpush1.bf16.msra.mxu0 %v443
        %1015 = vmatprep.subr.bf16.mxu0 %v428
        %1016 = vmatpush1.bf16.msra.mxu0 %v427
        %1017 = vmatprep.subr.bf16.mxu0 0
        %1018 = vmatpush2.bf16.msra.mxu0 0
        %1019 = vmatprep.subr.bf16.mxu0 0
        %1020 = vmatpush2.bf16.msra.mxu0 0
        %1021 = vmatprep.subr.bf16.mxu0 0
        %1022 = vmatpush2.bf16.msra.mxu0 0
        %1023 = vmatprep.subr.bf16.mxu0 0
        %1024 = vmatpush2.bf16.msra.mxu0 0
        %1025 = vmatprep.subr.bf16.mxu0 0
        %1026 = vmatpush2.bf16.msra.mxu0 0
        %1027 = vmatprep.subr.bf16.mxu0 0
        %1028 = vmatpush2.bf16.msra.mxu0 0
        %1029 = vmatprep.subr.bf16.mxu0 0
        %1030 = vmatpush2.bf16.msra.mxu0 0
        %1031 = vmatprep.subr.bf16.mxu0 0
        %1032 = vmatpush2.bf16.msra.mxu0 0
        %1033 = vmatprep.mubr.bf16.mxu0 0
        %1034 = vmatmul.mubr.bf16.gmra.mxu0 %v479
        %v1035 = vpop.f32.mrf.mxu0
        %v1036 = vadd.f32 0.0, %v1035
        %v1037 = vpop.f32.mrf.mxu0
        %v1038 = vadd.f32 0.0, %v1037
        %v1039 = vpop.f32.mrf.mxu0
        %v1040 = vadd.f32 0.0, %v1039
        %v1041 = vpop.f32.mrf.mxu0
        %v1042 = vadd.f32 0.0, %v1041
        %1043 = vmatprep.mubr.bf16.mxu0 0
        %1044 = vmatmul.mubr.bf16.gmra.mxu0 %v482
        %v1045 = vpop.f32.mrf.mxu0
        %v1046 = vadd.f32 0.0, %v1045
        %v1047 = vpop.f32.mrf.mxu0
        %v1048 = vadd.f32 0.0, %v1047
        %v1049 = vpop.f32.mrf.mxu0
        %v1050 = vadd.f32 0.0, %v1049
        %v1051 = vpop.f32.mrf.mxu0
        %v1052 = vadd.f32 0.0, %v1051
        %1053 = vmatprep.mubr.bf16.mxu0 0
        %1054 = vmatmul.mubr.bf16.gmra.mxu0 %v485
        %v1055 = vpop.f32.mrf.mxu0
        %v1056 = vadd.f32 0.0, %v1055
        %v1057 = vpop.f32.mrf.mxu0
        %v1058 = vadd.f32 0.0, %v1057
        %v1059 = vpop.f32.mrf.mxu0
        %v1060 = vadd.f32 0.0, %v1059
        %v1061 = vpop.f32.mrf.mxu0
        %v1062 = vadd.f32 0.0, %v1061
        %1063 = vmatprep.mubr.bf16.mxu0 0
        %1064 = vmatmul.mubr.bf16.gmra.mxu0 %v488
        %v1065 = vpop.f32.mrf.mxu0
        %v1066 = vadd.f32 0.0, %v1065
        %v1067 = vpop.f32.mrf.mxu0
        %v1068 = vadd.f32 0.0, %v1067
        %v1069 = vpop.f32.mrf.mxu0
        %v1070 = vadd.f32 0.0, %v1069
        %v1071 = vpop.f32.mrf.mxu0
        %v1072 = vadd.f32 0.0, %v1071
        %1073 = vdwg.mxu0
        %v1074 = vld [vmem:[#allocation2] sm:$0xff]
        %v1075 = vld [vmem:[#allocation2 + $0x8] sm:$0xff]
        %v1076 = vadd.f32 %v525, %v529
        %v1077 = vadd.f32 %v1076, %v535
        %v1078 = vadd.f32 %v1077, %v539
        %v1079 = vadd.f32 %v1078, %v545
        %v1080 = vadd.f32 %v1079, %v549
        %v1081 = vadd.f32 %v1080, %v555
        %v1082 = vadd.f32 %v1081, %v559
        %v1083 = vrot.slane %v1082, 4
        %v1084 = vadd.f32 %v1082, %v1083
        %v1085 = vrot.slane %v1084, 2
        %v1086 = vadd.f32 %v1084, %v1085
        %v1087 = vrot.slane %v1086, 1
        %v1088 = vadd.f32 %v1086, %v1087
        %v1089 = vadd.f32 %v527, %v531
        %v1090 = vadd.f32 %v1089, %v537
        %v1091 = vadd.f32 %v1090, %v541
        %v1092 = vadd.f32 %v1091, %v547
        %v1093 = vadd.f32 %v1092, %v551
        %v1094 = vadd.f32 %v1093, %v557
        %v1095 = vadd.f32 %v1094, %v561
        %v1096 = vrot.slane %v1095, 4
        %v1097 = vadd.f32 %v1095, %v1096
        %v1098 = vrot.slane %v1097, 2
        %v1099 = vadd.f32 %v1097, %v1098
        %v1100 = vrot.slane %v1099, 1
        %v1101 = vadd.f32 %v1099, %v1100
        %v1102 = vadd.f32 %v598, %v602
        %v1103 = vadd.f32 %v1102, %v608
        %v1104 = vadd.f32 %v1103, %v612
        %v1105 = vadd.f32 %v1104, %v618
        %v1106 = vadd.f32 %v1105, %v622
        %v1107 = vadd.f32 %v1106, %v628
        %v1108 = vadd.f32 %v1107, %v632
        %v1109 = vrot.slane %v1108, 4
        %v1110 = vadd.f32 %v1108, %v1109
        %v1111 = vrot.slane %v1110, 2
        %v1112 = vadd.f32 %v1110, %v1111
        %v1113 = vrot.slane %v1112, 1
        %v1114 = vadd.f32 %v1112, %v1113
        %v1115 = vadd.f32 %v600, %v604
        %v1116 = vadd.f32 %v1115, %v610
        %v1117 = vadd.f32 %v1116, %v614
        %v1118 = vadd.f32 %v1117, %v620
        %v1119 = vadd.f32 %v1118, %v624
        %v1120 = vadd.f32 %v1119, %v630
        %v1121 = vadd.f32 %v1120, %v634
        %v1122 = vrot.slane %v1121, 4
        %v1123 = vadd.f32 %v1121, %v1122
        %v1124 = vrot.slane %v1123, 2
        %v1125 = vadd.f32 %v1123, %v1124
        %v1126 = vrot.slane %v1125, 1
        %v1127 = vadd.f32 %v1125, %v1126
        %v1128 = vadd.f32 %v671, %v675
        %v1129 = vadd.f32 %v1128, %v681
        %v1130 = vadd.f32 %v1129, %v685
        %v1131 = vadd.f32 %v1130, %v691
        %v1132 = vadd.f32 %v1131, %v695
        %v1133 = vadd.f32 %v1132, %v701
        %v1134 = vadd.f32 %v1133, %v705
        %v1135 = vrot.slane %v1134, 4
        %v1136 = vadd.f32 %v1134, %v1135
        %v1137 = vrot.slane %v1136, 2
        %v1138 = vadd.f32 %v1136, %v1137
        %v1139 = vrot.slane %v1138, 1
        %v1140 = vadd.f32 %v1138, %v1139
        %v1141 = vadd.f32 %v673, %v677
        %v1142 = vadd.f32 %v1141, %v683
        %v1143 = vadd.f32 %v1142, %v687
        %v1144 = vadd.f32 %v1143, %v693
        %v1145 = vadd.f32 %v1144, %v697
        %v1146 = vadd.f32 %v1145, %v703
        %v1147 = vadd.f32 %v1146, %v707
        %v1148 = vrot.slane %v1147, 4
        %v1149 = vadd.f32 %v1147, %v1148
        %v1150 = vrot.slane %v1149, 2
        %v1151 = vadd.f32 %v1149, %v1150
        %v1152 = vrot.slane %v1151, 1
        %v1153 = vadd.f32 %v1151, %v1152
        %v1154 = vadd.f32 %v744, %v748
        %v1155 = vadd.f32 %v1154, %v754
        %v1156 = vadd.f32 %v1155, %v758
        %v1157 = vadd.f32 %v1156, %v764
        %v1158 = vadd.f32 %v1157, %v768
        %v1159 = vadd.f32 %v1158, %v774
        %v1160 = vadd.f32 %v1159, %v778
        %v1161 = vrot.slane %v1160, 4
        %v1162 = vadd.f32 %v1160, %v1161
        %v1163 = vrot.slane %v1162, 2
        %v1164 = vadd.f32 %v1162, %v1163
        %v1165 = vrot.slane %v1164, 1
        %v1166 = vadd.f32 %v1164, %v1165
        %v1167 = vadd.f32 %v746, %v750
        %v1168 = vadd.f32 %v1167, %v756
        %v1169 = vadd.f32 %v1168, %v760
        %v1170 = vadd.f32 %v1169, %v766
        %v1171 = vadd.f32 %v1170, %v770
        %v1172 = vadd.f32 %v1171, %v776
        %v1173 = vadd.f32 %v1172, %v780
        %v1174 = vrot.slane %v1173, 4
        %v1175 = vadd.f32 %v1173, %v1174
        %v1176 = vrot.slane %v1175, 2
        %v1177 = vadd.f32 %v1175, %v1176
        %v1178 = vrot.slane %v1177, 1
        %v1179 = vadd.f32 %v1177, %v1178
        %v1180 = vadd.f32 %v817, %v821
        %v1181 = vadd.f32 %v1180, %v827
        %v1182 = vadd.f32 %v1181, %v831
        %v1183 = vadd.f32 %v1182, %v837
        %v1184 = vadd.f32 %v1183, %v841
        %v1185 = vadd.f32 %v1184, %v847
        %v1186 = vadd.f32 %v1185, %v851
        %v1187 = vrot.slane %v1186, 4
        %v1188 = vadd.f32 %v1186, %v1187
        %v1189 = vrot.slane %v1188, 2
        %v1190 = vadd.f32 %v1188, %v1189
        %v1191 = vrot.slane %v1190, 1
        %v1192 = vadd.f32 %v1190, %v1191
        %v1193 = vadd.f32 %v819, %v823
        %v1194 = vadd.f32 %v1193, %v829
        %v1195 = vadd.f32 %v1194, %v833
        %v1196 = vadd.f32 %v1195, %v839
        %v1197 = vadd.f32 %v1196, %v843
        %v1198 = vadd.f32 %v1197, %v849
        %v1199 = vadd.f32 %v1198, %v853
        %v1200 = vrot.slane %v1199, 4
        %v1201 = vadd.f32 %v1199, %v1200
        %v1202 = vrot.slane %v1201, 2
        %v1203 = vadd.f32 %v1201, %v1202
        %v1204 = vrot.slane %v1203, 1
        %v1205 = vadd.f32 %v1203, %v1204
        %v1206 = vadd.f32 %v890, %v894
        %v1207 = vadd.f32 %v1206, %v900
        %v1208 = vadd.f32 %v1207, %v904
        %v1209 = vadd.f32 %v1208, %v910
        %v1210 = vadd.f32 %v1209, %v914
        %v1211 = vadd.f32 %v1210, %v920
        %v1212 = vadd.f32 %v1211, %v924
        %v1213 = vrot.slane %v1212, 4
        %v1214 = vadd.f32 %v1212, %v1213
        %v1215 = vrot.slane %v1214, 2
        %v1216 = vadd.f32 %v1214, %v1215
        %v1217 = vrot.slane %v1216, 1
        %v1218 = vadd.f32 %v1216, %v1217
        %v1219 = vadd.f32 %v892, %v896
        %v1220 = vadd.f32 %v1219, %v902
        %v1221 = vadd.f32 %v1220, %v906
        %v1222 = vadd.f32 %v1221, %v912
        %v1223 = vadd.f32 %v1222, %v916
        %v1224 = vadd.f32 %v1223, %v922
        %v1225 = vadd.f32 %v1224, %v926
        %v1226 = vrot.slane %v1225, 4
        %v1227 = vadd.f32 %v1225, %v1226
        %v1228 = vrot.slane %v1227, 2
        %v1229 = vadd.f32 %v1227, %v1228
        %v1230 = vrot.slane %v1229, 1
        %v1231 = vadd.f32 %v1229, %v1230
        %v1232 = vadd.f32 %v963, %v967
        %v1233 = vadd.f32 %v1232, %v973
        %v1234 = vadd.f32 %v1233, %v977
        %v1235 = vadd.f32 %v1234, %v983
        %v1236 = vadd.f32 %v1235, %v987
        %v1237 = vadd.f32 %v1236, %v993
        %v1238 = vadd.f32 %v1237, %v997
        %v1239 = vrot.slane %v1238, 4
        %v1240 = vadd.f32 %v1238, %v1239
        %v1241 = vrot.slane %v1240, 2
        %v1242 = vadd.f32 %v1240, %v1241
        %v1243 = vrot.slane %v1242, 1
        %v1244 = vadd.f32 %v1242, %v1243
        %v1245 = vadd.f32 %v965, %v969
        %v1246 = vadd.f32 %v1245, %v975
        %v1247 = vadd.f32 %v1246, %v979
        %v1248 = vadd.f32 %v1247, %v985
        %v1249 = vadd.f32 %v1248, %v989
        %v1250 = vadd.f32 %v1249, %v995
        %v1251 = vadd.f32 %v1250, %v999
        %v1252 = vrot.slane %v1251, 4
        %v1253 = vadd.f32 %v1251, %v1252
        %v1254 = vrot.slane %v1253, 2
        %v1255 = vadd.f32 %v1253, %v1254
        %v1256 = vrot.slane %v1255, 1
        %v1257 = vadd.f32 %v1255, %v1256
        %v1258 = vadd.f32 %v1036, %v1040
        %v1259 = vadd.f32 %v1258, %v1046
        %v1260 = vadd.f32 %v1259, %v1050
        %v1261 = vadd.f32 %v1260, %v1056
        %v1262 = vadd.f32 %v1261, %v1060
        %v1263 = vadd.f32 %v1262, %v1066
        %v1264 = vadd.f32 %v1263, %v1070
        %v1265 = vrot.slane %v1264, 4
        %v1266 = vadd.f32 %v1264, %v1265
        %v1267 = vrot.slane %v1266, 2
        %v1268 = vadd.f32 %v1266, %v1267
        %v1269 = vrot.slane %v1268, 1
        %v1270 = vadd.f32 %v1268, %v1269
        %v1271 = vadd.f32 %v1038, %v1042
        %v1272 = vadd.f32 %v1271, %v1048
        %v1273 = vadd.f32 %v1272, %v1052
        %v1274 = vadd.f32 %v1273, %v1058
        %v1275 = vadd.f32 %v1274, %v1062
        %v1276 = vadd.f32 %v1275, %v1068
        %v1277 = vadd.f32 %v1276, %v1072
        %v1278 = vrot.slane %v1277, 4
        %v1279 = vadd.f32 %v1277, %v1278
        %v1280 = vrot.slane %v1279, 2
        %v1281 = vadd.f32 %v1279, %v1280
        %v1282 = vrot.slane %v1281, 1
        %v1283 = vadd.f32 %v1281, %v1282
        %v1300 = vcombine.low %v1088, %v1101
        %v1301 = vcombine.low %v1114, %v1127
        %v1302 = vcombine.low %v1140, %v1153
        %v1303 = vcombine.low %v1166, %v1179
        %v1305 = vunpack.c.l.s4 1966171168
        %v1306 = vunpack.c.0.s8 %v1305
        %v1307 = vlaneseq
        %v1308 = vshrl.u32 %v1307, 7
        %v1309 = vsub.s32 %v1306, %v1308
        %v1310 = vrot.slane %v1300, %v1309
        %v1312 = vunpack.c.l.s4 1966171168
        %v1313 = vunpack.c.0.s8 %v1312
        %v1314 = vlaneseq
        %v1315 = vshrl.u32 %v1314, 7
        %v1316 = vsub.s32 %v1313, %v1315
        %v1317 = vrot.slane %v1301, %v1316
        %v1319 = vunpack.c.l.s4 1966171168
        %v1320 = vunpack.c.0.s8 %v1319
        %v1321 = vlaneseq
        %v1322 = vshrl.u32 %v1321, 7
        %v1323 = vsub.s32 %v1320, %v1322
        %v1324 = vrot.slane %v1302, %v1323
        %v1326 = vunpack.c.l.s4 1966171168
        %v1327 = vunpack.c.0.s8 %v1326
        %v1328 = vlaneseq
        %v1329 = vshrl.u32 %v1328, 7
        %v1330 = vsub.s32 %v1327, %v1329
        %v1331 = vrot.slane %v1303, %v1330
        %v1332 = vcombine.low %v1310, %v1317
        %v1333 = vcombine.low %v1324, %v1331
        %v1335 = vunpack.c.l.s4 1966171168
        %v1336 = vunpack.c.0.s8 %v1335
        %v1337 = vlaneseq
        %v1338 = vshrl.u32 %v1337, 7
        %v1339 = vsub.s32 %v1336, %v1338
        %v1340 = vrot.slane %v1332, %v1339
        %v1342 = vunpack.c.l.s4 1966171168
        %v1343 = vunpack.c.0.s8 %v1342
        %v1344 = vlaneseq
        %v1345 = vshrl.u32 %v1344, 7
        %v1346 = vsub.s32 %v1343, %v1345
        %v1347 = vrot.slane %v1333, %v1346
        %v1348 = vcombine.low %v1340, %v1347
        %v1349 = vcombine.low %v1192, %v1205
        %v1350 = vcombine.low %v1218, %v1231
        %v1351 = vcombine.low %v1244, %v1257
        %v1352 = vcombine.low %v1270, %v1283
        %v1354 = vunpack.c.l.s4 1966171168
        %v1355 = vunpack.c.0.s8 %v1354
        %v1356 = vlaneseq
        %v1357 = vshrl.u32 %v1356, 7
        %v1358 = vsub.s32 %v1355, %v1357
        %v1359 = vrot.slane %v1349, %v1358
        %v1361 = vunpack.c.l.s4 1966171168
        %v1362 = vunpack.c.0.s8 %v1361
        %v1363 = vlaneseq
        %v1364 = vshrl.u32 %v1363, 7
        %v1365 = vsub.s32 %v1362, %v1364
        %v1366 = vrot.slane %v1350, %v1365
        %v1368 = vunpack.c.l.s4 1966171168
        %v1369 = vunpack.c.0.s8 %v1368
        %v1370 = vlaneseq
        %v1371 = vshrl.u32 %v1370, 7
        %v1372 = vsub.s32 %v1369, %v1371
        %v1373 = vrot.slane %v1351, %v1372
        %v1375 = vunpack.c.l.s4 1966171168
        %v1376 = vunpack.c.0.s8 %v1375
        %v1377 = vlaneseq
        %v1378 = vshrl.u32 %v1377, 7
        %v1379 = vsub.s32 %v1376, %v1378
        %v1380 = vrot.slane %v1352, %v1379
        %v1381 = vcombine.low %v1359, %v1366
        %v1382 = vcombine.low %v1373, %v1380
        %v1384 = vunpack.c.l.s4 1966171168
        %v1385 = vunpack.c.0.s8 %v1384
        %v1386 = vlaneseq
        %v1387 = vshrl.u32 %v1386, 7
        %v1388 = vsub.s32 %v1385, %v1387
        %v1389 = vrot.slane %v1381, %v1388
        %v1391 = vunpack.c.l.s4 1966171168
        %v1392 = vunpack.c.0.s8 %v1391
        %v1393 = vlaneseq
        %v1394 = vshrl.u32 %v1393, 7
        %v1395 = vsub.s32 %v1392, %v1394
        %v1396 = vrot.slane %v1382, %v1395
        %v1397 = vcombine.low %v1389, %v1396
        %v1400 = vadd.f32 %v1074, %v1348
        %v1401 = vadd.f32 %v1075, %v1397
        %1402 = vst [vmem:[#allocation2] sm:$0xff] %v1400
        %1403 = vst [vmem:[#allocation2 + $0x8] sm:$0xff] %v1401
        // Predicated region
        $region45: #{firstnet_forward.1} parent=39 // pred_check
          %p1404 = pneg %p251
        $region46: #{firstnet_forward.1} parent=39 // pred_check_branch
          %1406 = sbr.rel (%p1404) target = $region48
        $region47: #{firstnet_forward.1} parent=39 // pred_region
          %v1407 = vld [vmem:[#allocation2] sm:$0xff]
          %v1408 = vld [vmem:[#allocation2 + $0x8] sm:$0xff]
          %v1409 = vmul.f32 %v1407, 0.015625
          %v1410 = vmul.f32 %v1408, 0.015625
          %v1411 = vld [vmem:[%s2] sm:$0xff]
          %v1412 = vld [vmem:[%s2 + $0x8] sm:$0xff]
          %v1413 = vadd.f32 %v1409, %v1411
          %v1414 = vadd.f32 %v1410, %v1412
          %vm1415 = vcmp.ge.f32.partialorder %v1413, 0.0
          %vm1416 = vcmp.ge.f32.partialorder %v1414, 0.0
          %v1417 = vmul.f32 %v1413, 0.01
          %v1418 = vmul.f32 %v1414, 0.01
          %v1419 = vsel %vm1415, %v1413, %v1417
          %v1420 = vsel %vm1416, %v1414, %v1418
          %v1423 = vlaneseq
          %v1424 = vshrl.u32 %v1423, 7
          %v1425 = vsub.s32 0, %v1424
          %v1426 = vrot.slane %v1419, %v1425
          %v1427 = vlaneseq
          %v1428 = vshrl.u32 %v1427, 7
          %v1429 = vsub.s32 1, %v1428
          %v1430 = vrot.slane %v1419, %v1429
          %v1431 = vlaneseq
          %v1432 = vshrl.u32 %v1431, 7
          %v1433 = vsub.s32 2, %v1432
          %v1434 = vrot.slane %v1419, %v1433
          %v1435 = vlaneseq
          %v1436 = vshrl.u32 %v1435, 7
          %v1437 = vsub.s32 3, %v1436
          %v1438 = vrot.slane %v1419, %v1437
          %v1439 = vlaneseq
          %v1440 = vshrl.u32 %v1439, 7
          %v1441 = vsub.s32 4, %v1440
          %v1442 = vrot.slane %v1419, %v1441
          %v1443 = vlaneseq
          %v1444 = vshrl.u32 %v1443, 7
          %v1445 = vsub.s32 5, %v1444
          %v1446 = vrot.slane %v1419, %v1445
          %v1447 = vlaneseq
          %v1448 = vshrl.u32 %v1447, 7
          %v1449 = vsub.s32 6, %v1448
          %v1450 = vrot.slane %v1419, %v1449
          %v1451 = vlaneseq
          %v1452 = vshrl.u32 %v1451, 7
          %v1453 = vsub.s32 7, %v1452
          %v1454 = vrot.slane %v1419, %v1453
          %v1455 = vlaneseq
          %v1456 = vshrl.u32 %v1455, 7
          %v1457 = vsub.s32 0, %v1456
          %v1458 = vrot.slane %v1420, %v1457
          %v1459 = vlaneseq
          %v1460 = vshrl.u32 %v1459, 7
          %v1461 = vsub.s32 1, %v1460
          %v1462 = vrot.slane %v1420, %v1461
          %v1463 = vlaneseq
          %v1464 = vshrl.u32 %v1463, 7
          %v1465 = vsub.s32 2, %v1464
          %v1466 = vrot.slane %v1420, %v1465
          %v1467 = vlaneseq
          %v1468 = vshrl.u32 %v1467, 7
          %v1469 = vsub.s32 3, %v1468
          %v1470 = vrot.slane %v1420, %v1469
          %v1471 = vlaneseq
          %v1472 = vshrl.u32 %v1471, 7
          %v1473 = vsub.s32 4, %v1472
          %v1474 = vrot.slane %v1420, %v1473
          %v1475 = vlaneseq
          %v1476 = vshrl.u32 %v1475, 7
          %v1477 = vsub.s32 5, %v1476
          %v1478 = vrot.slane %v1420, %v1477
          %v1479 = vlaneseq
          %v1480 = vshrl.u32 %v1479, 7
          %v1481 = vsub.s32 6, %v1480
          %v1482 = vrot.slane %v1420, %v1481
          %v1483 = vlaneseq
          %v1484 = vshrl.u32 %v1483, 7
          %v1485 = vsub.s32 7, %v1484
          %v1486 = vrot.slane %v1420, %v1485
          %v1503 = vpack.c.bf16 %v1426, %v1426
          %v1504 = vpack.c.bf16 %v1430, %v1430
          %v1505 = vpack.c.bf16 %v1434, %v1434
          %v1506 = vpack.c.bf16 %v1438, %v1438
          %v1507 = vpack.c.bf16 %v1442, %v1442
          %v1508 = vpack.c.bf16 %v1446, %v1446
          %v1509 = vpack.c.bf16 %v1450, %v1450
          %v1510 = vpack.c.bf16 %v1454, %v1454
          %v1511 = vpack.c.bf16 %v1458, %v1458
          %v1512 = vpack.c.bf16 %v1462, %v1462
          %v1513 = vpack.c.bf16 %v1466, %v1466
          %v1514 = vpack.c.bf16 %v1470, %v1470
          %v1515 = vpack.c.bf16 %v1474, %v1474
          %v1516 = vpack.c.bf16 %v1478, %v1478
          %v1517 = vpack.c.bf16 %v1482, %v1482
          %v1518 = vpack.c.bf16 %v1486, %v1486
          %v1519 = vld [vmem:[%s3] sm:$0xf]
          %v1520 = vld [vmem:[%s3 + $0x4] sm:$0xf]
          %v1521 = vld [vmem:[%s3 + $0x8] sm:$0xf]
          %v1522 = vld [vmem:[%s3 + $0xc] sm:$0xf]
          %v1523 = vld [vmem:[%s3 + $0x10] sm:$0xf]
          %v1524 = vld [vmem:[%s3 + $0x14] sm:$0xf]
          %v1525 = vld [vmem:[%s3 + $0x18] sm:$0xf]
          %v1526 = vld [vmem:[%s3 + $0x1c] sm:$0xf]
          %v1527 = vld [vmem:[%s3 + $0x20] sm:$0xf]
          %v1528 = vld [vmem:[%s3 + $0x24] sm:$0xf]
          %v1529 = vld [vmem:[%s3 + $0x28] sm:$0xf]
          %v1530 = vld [vmem:[%s3 + $0x2c] sm:$0xf]
          %v1531 = vld [vmem:[%s3 + $0x30] sm:$0xf]
          %v1532 = vld [vmem:[%s3 + $0x34] sm:$0xf]
          %v1533 = vld [vmem:[%s3 + $0x38] sm:$0xf]
          %v1534 = vld [vmem:[%s3 + $0x3c] sm:$0xf]
          %v1535 = vld [vmem:[%s3 + $0x40] sm:$0xf]
          %v1536 = vld [vmem:[%s3 + $0x44] sm:$0xf]
          %v1537 = vld [vmem:[%s3 + $0x48] sm:$0xf]
          %v1538 = vld [vmem:[%s3 + $0x4c] sm:$0xf]
          %v1539 = vld [vmem:[%s3 + $0x50] sm:$0xf]
          %v1540 = vld [vmem:[%s3 + $0x54] sm:$0xf]
          %v1541 = vld [vmem:[%s3 + $0x58] sm:$0xf]
          %v1542 = vld [vmem:[%s3 + $0x5c] sm:$0xf]
          %v1543 = vld [vmem:[%s3 + $0x60] sm:$0xf]
          %v1544 = vld [vmem:[%s3 + $0x64] sm:$0xf]
          %v1545 = vld [vmem:[%s3 + $0x68] sm:$0xf]
          %v1546 = vld [vmem:[%s3 + $0x6c] sm:$0xf]
          %v1547 = vld [vmem:[%s3 + $0x70] sm:$0xf]
          %v1548 = vld [vmem:[%s3 + $0x74] sm:$0xf]
          %v1549 = vld [vmem:[%s3 + $0x78] sm:$0xf]
          %v1550 = vld [vmem:[%s3 + $0x7c] sm:$0xf]
          %v1551 = vld [vmem:[%s3 + $0x80] sm:$0xf]
          %v1552 = vld [vmem:[%s3 + $0x84] sm:$0xf]
          %v1553 = vld [vmem:[%s3 + $0x88] sm:$0xf]
          %v1554 = vld [vmem:[%s3 + $0x8c] sm:$0xf]
          %v1555 = vld [vmem:[%s3 + $0x90] sm:$0xf]
          %v1556 = vld [vmem:[%s3 + $0x94] sm:$0xf]
          %v1557 = vld [vmem:[%s3 + $0x98] sm:$0xf]
          %v1558 = vld [vmem:[%s3 + $0x9c] sm:$0xf]
          %v1559 = vld [vmem:[%s3 + $0xa0] sm:$0xf]
          %v1560 = vld [vmem:[%s3 + $0xa4] sm:$0xf]
          %v1561 = vld [vmem:[%s3 + $0xa8] sm:$0xf]
          %v1562 = vld [vmem:[%s3 + $0xac] sm:$0xf]
          %v1563 = vld [vmem:[%s3 + $0xb0] sm:$0xf]
          %v1564 = vld [vmem:[%s3 + $0xb4] sm:$0xf]
          %v1565 = vld [vmem:[%s3 + $0xb8] sm:$0xf]
          %v1566 = vld [vmem:[%s3 + $0xbc] sm:$0xf]
          %v1567 = vld [vmem:[%s3 + $0xc0] sm:$0xf]
          %v1568 = vld [vmem:[%s3 + $0xc4] sm:$0xf]
          %v1569 = vld [vmem:[%s3 + $0xc8] sm:$0xf]
          %v1570 = vld [vmem:[%s3 + $0xcc] sm:$0xf]
          %v1571 = vld [vmem:[%s3 + $0xd0] sm:$0xf]
          %v1572 = vld [vmem:[%s3 + $0xd4] sm:$0xf]
          %v1573 = vld [vmem:[%s3 + $0xd8] sm:$0xf]
          %v1574 = vld [vmem:[%s3 + $0xdc] sm:$0xf]
          %v1575 = vld [vmem:[%s3 + $0xe0] sm:$0xf]
          %v1576 = vld [vmem:[%s3 + $0xe4] sm:$0xf]
          %v1577 = vld [vmem:[%s3 + $0xe8] sm:$0xf]
          %v1578 = vld [vmem:[%s3 + $0xec] sm:$0xf]
          %v1579 = vld [vmem:[%s3 + $0xf0] sm:$0xf]
          %v1580 = vld [vmem:[%s3 + $0xf4] sm:$0xf]
          %v1581 = vld [vmem:[%s3 + $0xf8] sm:$0xf]
          %v1582 = vld [vmem:[%s3 + $0xfc] sm:$0xf]
          %v1583 = vld [vmem:[%s3 + $0x100] sm:$0xf]
          %v1584 = vld [vmem:[%s3 + $0x104] sm:$0xf]
          %v1585 = vld [vmem:[%s3 + $0x108] sm:$0xf]
          %v1586 = vld [vmem:[%s3 + $0x10c] sm:$0xf]
          %v1587 = vld [vmem:[%s3 + $0x110] sm:$0xf]
          %v1588 = vld [vmem:[%s3 + $0x114] sm:$0xf]
          %v1589 = vld [vmem:[%s3 + $0x118] sm:$0xf]
          %v1590 = vld [vmem:[%s3 + $0x11c] sm:$0xf]
          %v1591 = vld [vmem:[%s3 + $0x120] sm:$0xf]
          %v1592 = vld [vmem:[%s3 + $0x124] sm:$0xf]
          %v1593 = vld [vmem:[%s3 + $0x128] sm:$0xf]
          %v1594 = vld [vmem:[%s3 + $0x12c] sm:$0xf]
          %v1595 = vld [vmem:[%s3 + $0x130] sm:$0xf]
          %v1596 = vld [vmem:[%s3 + $0x134] sm:$0xf]
          %v1597 = vld [vmem:[%s3 + $0x138] sm:$0xf]
          %v1598 = vld [vmem:[%s3 + $0x13c] sm:$0xf]
          %v1599 = vld [vmem:[%s3 + $0x140] sm:$0xf]
          %v1600 = vld [vmem:[%s3 + $0x144] sm:$0xf]
          %v1601 = vld [vmem:[%s3 + $0x148] sm:$0xf]
          %v1602 = vld [vmem:[%s3 + $0x14c] sm:$0xf]
          %v1603 = vld [vmem:[%s3 + $0x150] sm:$0xf]
          %v1604 = vld [vmem:[%s3 + $0x154] sm:$0xf]
          %v1605 = vld [vmem:[%s3 + $0x158] sm:$0xf]
          %v1606 = vld [vmem:[%s3 + $0x15c] sm:$0xf]
          %v1607 = vld [vmem:[%s3 + $0x160] sm:$0xf]
          %v1608 = vld [vmem:[%s3 + $0x164] sm:$0xf]
          %v1609 = vld [vmem:[%s3 + $0x168] sm:$0xf]
          %v1610 = vld [vmem:[%s3 + $0x16c] sm:$0xf]
          %v1611 = vld [vmem:[%s3 + $0x170] sm:$0xf]
          %v1612 = vld [vmem:[%s3 + $0x174] sm:$0xf]
          %v1613 = vld [vmem:[%s3 + $0x178] sm:$0xf]
          %v1614 = vld [vmem:[%s3 + $0x17c] sm:$0xf]
          %v1615 = vld [vmem:[%s3 + $0x180] sm:$0xf]
          %v1616 = vld [vmem:[%s3 + $0x184] sm:$0xf]
          %v1617 = vld [vmem:[%s3 + $0x188] sm:$0xf]
          %v1618 = vld [vmem:[%s3 + $0x18c] sm:$0xf]
          %v1619 = vld [vmem:[%s3 + $0x190] sm:$0xf]
          %v1620 = vld [vmem:[%s3 + $0x194] sm:$0xf]
          %v1621 = vld [vmem:[%s3 + $0x198] sm:$0xf]
          %v1622 = vld [vmem:[%s3 + $0x19c] sm:$0xf]
          %v1623 = vld [vmem:[%s3 + $0x1a0] sm:$0xf]
          %v1624 = vld [vmem:[%s3 + $0x1a4] sm:$0xf]
          %v1625 = vld [vmem:[%s3 + $0x1a8] sm:$0xf]
          %v1626 = vld [vmem:[%s3 + $0x1ac] sm:$0xf]
          %v1627 = vld [vmem:[%s3 + $0x1b0] sm:$0xf]
          %v1628 = vld [vmem:[%s3 + $0x1b4] sm:$0xf]
          %v1629 = vld [vmem:[%s3 + $0x1b8] sm:$0xf]
          %v1630 = vld [vmem:[%s3 + $0x1bc] sm:$0xf]
          %v1631 = vld [vmem:[%s3 + $0x1c0] sm:$0xf]
          %v1632 = vld [vmem:[%s3 + $0x1c4] sm:$0xf]
          %v1633 = vld [vmem:[%s3 + $0x1c8] sm:$0xf]
          %v1634 = vld [vmem:[%s3 + $0x1cc] sm:$0xf]
          %v1635 = vld [vmem:[%s3 + $0x1d0] sm:$0xf]
          %v1636 = vld [vmem:[%s3 + $0x1d4] sm:$0xf]
          %v1637 = vld [vmem:[%s3 + $0x1d8] sm:$0xf]
          %v1638 = vld [vmem:[%s3 + $0x1dc] sm:$0xf]
          %v1639 = vld [vmem:[%s3 + $0x1e0] sm:$0xf]
          %v1640 = vld [vmem:[%s3 + $0x1e4] sm:$0xf]
          %v1641 = vld [vmem:[%s3 + $0x1e8] sm:$0xf]
          %v1642 = vld [vmem:[%s3 + $0x1ec] sm:$0xf]
          %v1643 = vld [vmem:[%s3 + $0x1f0] sm:$0xf]
          %v1644 = vld [vmem:[%s3 + $0x1f4] sm:$0xf]
          %v1645 = vld [vmem:[%s3 + $0x1f8] sm:$0xf]
          %v1646 = vld [vmem:[%s3 + $0x1fc] sm:$0xf]
          %v1647 = vld [vmem:[%s3 + $0x200] sm:$0xf]
          %v1648 = vld [vmem:[%s3 + $0x204] sm:$0xf]
          %v1649 = vld [vmem:[%s3 + $0x208] sm:$0xf]
          %v1650 = vld [vmem:[%s3 + $0x20c] sm:$0xf]
          %v1651 = vld [vmem:[%s3 + $0x210] sm:$0xf]
          %v1652 = vld [vmem:[%s3 + $0x214] sm:$0xf]
          %v1653 = vld [vmem:[%s3 + $0x218] sm:$0xf]
          %v1654 = vld [vmem:[%s3 + $0x21c] sm:$0xf]
          %v1655 = vld [vmem:[%s3 + $0x220] sm:$0xf]
          %v1656 = vld [vmem:[%s3 + $0x224] sm:$0xf]
          %v1657 = vld [vmem:[%s3 + $0x228] sm:$0xf]
          %v1658 = vld [vmem:[%s3 + $0x22c] sm:$0xf]
          %v1659 = vld [vmem:[%s3 + $0x230] sm:$0xf]
          %v1660 = vld [vmem:[%s3 + $0x234] sm:$0xf]
          %v1661 = vld [vmem:[%s3 + $0x238] sm:$0xf]
          %v1662 = vld [vmem:[%s3 + $0x23c] sm:$0xf]
          %v1663 = vld [vmem:[%s3 + $0x240] sm:$0xf]
          %v1664 = vld [vmem:[%s3 + $0x244] sm:$0xf]
          %v1665 = vld [vmem:[%s3 + $0x248] sm:$0xf]
          %v1666 = vld [vmem:[%s3 + $0x24c] sm:$0xf]
          %v1667 = vld [vmem:[%s3 + $0x250] sm:$0xf]
          %v1668 = vld [vmem:[%s3 + $0x254] sm:$0xf]
          %v1669 = vld [vmem:[%s3 + $0x258] sm:$0xf]
          %v1670 = vld [vmem:[%s3 + $0x25c] sm:$0xf]
          %v1671 = vld [vmem:[%s3 + $0x260] sm:$0xf]
          %v1672 = vld [vmem:[%s3 + $0x264] sm:$0xf]
          %v1673 = vld [vmem:[%s3 + $0x268] sm:$0xf]
          %v1674 = vld [vmem:[%s3 + $0x26c] sm:$0xf]
          %v1675 = vld [vmem:[%s3 + $0x270] sm:$0xf]
          %v1676 = vld [vmem:[%s3 + $0x274] sm:$0xf]
          %v1677 = vld [vmem:[%s3 + $0x278] sm:$0xf]
          %v1678 = vld [vmem:[%s3 + $0x27c] sm:$0xf]
          %v1679 = vld [vmem:[%s3 + $0x280] sm:$0xf]
          %v1680 = vld [vmem:[%s3 + $0x284] sm:$0xf]
          %v1681 = vld [vmem:[%s3 + $0x288] sm:$0xf]
          %v1682 = vld [vmem:[%s3 + $0x28c] sm:$0xf]
          %v1683 = vld [vmem:[%s3 + $0x290] sm:$0xf]
          %v1684 = vld [vmem:[%s3 + $0x294] sm:$0xf]
          %v1685 = vld [vmem:[%s3 + $0x298] sm:$0xf]
          %v1686 = vld [vmem:[%s3 + $0x29c] sm:$0xf]
          %v1687 = vld [vmem:[%s3 + $0x2a0] sm:$0xf]
          %v1688 = vld [vmem:[%s3 + $0x2a4] sm:$0xf]
          %v1689 = vld [vmem:[%s3 + $0x2a8] sm:$0xf]
          %v1690 = vld [vmem:[%s3 + $0x2ac] sm:$0xf]
          %v1691 = vld [vmem:[%s3 + $0x2b0] sm:$0xf]
          %v1692 = vld [vmem:[%s3 + $0x2b4] sm:$0xf]
          %v1693 = vld [vmem:[%s3 + $0x2b8] sm:$0xf]
          %v1694 = vld [vmem:[%s3 + $0x2bc] sm:$0xf]
          %v1695 = vld [vmem:[%s3 + $0x2c0] sm:$0xf]
          %v1696 = vld [vmem:[%s3 + $0x2c4] sm:$0xf]
          %v1697 = vld [vmem:[%s3 + $0x2c8] sm:$0xf]
          %v1698 = vld [vmem:[%s3 + $0x2cc] sm:$0xf]
          %v1699 = vld [vmem:[%s3 + $0x2d0] sm:$0xf]
          %v1700 = vld [vmem:[%s3 + $0x2d4] sm:$0xf]
          %v1701 = vld [vmem:[%s3 + $0x2d8] sm:$0xf]
          %v1702 = vld [vmem:[%s3 + $0x2dc] sm:$0xf]
          %v1703 = vld [vmem:[%s3 + $0x2e0] sm:$0xf]
          %v1704 = vld [vmem:[%s3 + $0x2e4] sm:$0xf]
          %v1705 = vld [vmem:[%s3 + $0x2e8] sm:$0xf]
          %v1706 = vld [vmem:[%s3 + $0x2ec] sm:$0xf]
          %v1707 = vld [vmem:[%s3 + $0x2f0] sm:$0xf]
          %v1708 = vld [vmem:[%s3 + $0x2f4] sm:$0xf]
          %v1709 = vld [vmem:[%s3 + $0x2f8] sm:$0xf]
          %v1710 = vld [vmem:[%s3 + $0x2fc] sm:$0xf]
          %v1711 = vld [vmem:[%s3 + $0x300] sm:$0xf]
          %v1712 = vld [vmem:[%s3 + $0x304] sm:$0xf]
          %v1713 = vld [vmem:[%s3 + $0x308] sm:$0xf]
          %v1714 = vld [vmem:[%s3 + $0x30c] sm:$0xf]
          %v1715 = vld [vmem:[%s3 + $0x310] sm:$0xf]
          %v1716 = vld [vmem:[%s3 + $0x314] sm:$0xf]
          %v1717 = vld [vmem:[%s3 + $0x318] sm:$0xf]
          %v1718 = vld [vmem:[%s3 + $0x31c] sm:$0xf]
          %v1719 = vld [vmem:[%s3 + $0x320] sm:$0xf]
          %v1720 = vld [vmem:[%s3 + $0x324] sm:$0xf]
          %v1721 = vld [vmem:[%s3 + $0x328] sm:$0xf]
          %v1722 = vld [vmem:[%s3 + $0x32c] sm:$0xf]
          %v1723 = vld [vmem:[%s3 + $0x330] sm:$0xf]
          %v1724 = vld [vmem:[%s3 + $0x334] sm:$0xf]
          %v1725 = vld [vmem:[%s3 + $0x338] sm:$0xf]
          %v1726 = vld [vmem:[%s3 + $0x33c] sm:$0xf]
          %v1727 = vld [vmem:[%s3 + $0x340] sm:$0xf]
          %v1728 = vld [vmem:[%s3 + $0x344] sm:$0xf]
          %v1729 = vld [vmem:[%s3 + $0x348] sm:$0xf]
          %v1730 = vld [vmem:[%s3 + $0x34c] sm:$0xf]
          %v1731 = vld [vmem:[%s3 + $0x350] sm:$0xf]
          %v1732 = vld [vmem:[%s3 + $0x354] sm:$0xf]
          %v1733 = vld [vmem:[%s3 + $0x358] sm:$0xf]
          %v1734 = vld [vmem:[%s3 + $0x35c] sm:$0xf]
          %v1735 = vld [vmem:[%s3 + $0x360] sm:$0xf]
          %v1736 = vld [vmem:[%s3 + $0x364] sm:$0xf]
          %v1737 = vld [vmem:[%s3 + $0x368] sm:$0xf]
          %v1738 = vld [vmem:[%s3 + $0x36c] sm:$0xf]
          %v1739 = vld [vmem:[%s3 + $0x370] sm:$0xf]
          %v1740 = vld [vmem:[%s3 + $0x374] sm:$0xf]
          %v1741 = vld [vmem:[%s3 + $0x378] sm:$0xf]
          %v1742 = vld [vmem:[%s3 + $0x37c] sm:$0xf]
          %v1743 = vld [vmem:[%s3 + $0x380] sm:$0xf]
          %v1744 = vld [vmem:[%s3 + $0x384] sm:$0xf]
          %v1745 = vld [vmem:[%s3 + $0x388] sm:$0xf]
          %v1746 = vld [vmem:[%s3 + $0x38c] sm:$0xf]
          %v1747 = vld [vmem:[%s3 + $0x390] sm:$0xf]
          %v1748 = vld [vmem:[%s3 + $0x394] sm:$0xf]
          %v1749 = vld [vmem:[%s3 + $0x398] sm:$0xf]
          %v1750 = vld [vmem:[%s3 + $0x39c] sm:$0xf]
          %v1751 = vld [vmem:[%s3 + $0x3a0] sm:$0xf]
          %v1752 = vld [vmem:[%s3 + $0x3a4] sm:$0xf]
          %v1753 = vld [vmem:[%s3 + $0x3a8] sm:$0xf]
          %v1754 = vld [vmem:[%s3 + $0x3ac] sm:$0xf]
          %v1755 = vld [vmem:[%s3 + $0x3b0] sm:$0xf]
          %v1756 = vld [vmem:[%s3 + $0x3b4] sm:$0xf]
          %v1757 = vld [vmem:[%s3 + $0x3b8] sm:$0xf]
          %v1758 = vld [vmem:[%s3 + $0x3bc] sm:$0xf]
          %v1759 = vld [vmem:[%s3 + $0x3c0] sm:$0xf]
          %v1760 = vld [vmem:[%s3 + $0x3c4] sm:$0xf]
          %v1761 = vld [vmem:[%s3 + $0x3c8] sm:$0xf]
          %v1762 = vld [vmem:[%s3 + $0x3cc] sm:$0xf]
          %v1763 = vld [vmem:[%s3 + $0x3d0] sm:$0xf]
          %v1764 = vld [vmem:[%s3 + $0x3d4] sm:$0xf]
          %v1765 = vld [vmem:[%s3 + $0x3d8] sm:$0xf]
          %v1766 = vld [vmem:[%s3 + $0x3dc] sm:$0xf]
          %v1767 = vld [vmem:[%s3 + $0x3e0] sm:$0xf]
          %v1768 = vld [vmem:[%s3 + $0x3e4] sm:$0xf]
          %v1769 = vld [vmem:[%s3 + $0x3e8] sm:$0xf]
          %v1770 = vld [vmem:[%s3 + $0x3ec] sm:$0xf]
          %v1771 = vld [vmem:[%s3 + $0x3f0] sm:$0xf]
          %v1772 = vld [vmem:[%s3 + $0x3f4] sm:$0xf]
          %v1773 = vld [vmem:[%s3 + $0x3f8] sm:$0xf]
          %v1774 = vld [vmem:[%s3 + $0x3fc] sm:$0xf]
          %v1775 = vld [vmem:[%s4] sm:$0x1]
          %v2032 = vunpack.c.l.b16 %v1519
          %v2033 = vunpack.c.l.b16 %v1520
          %v2034 = vunpack.c.l.b16 %v1521
          %v2035 = vunpack.c.l.b16 %v1522
          %v2036 = vunpack.c.l.b16 %v1523
          %v2037 = vunpack.c.l.b16 %v1524
          %v2038 = vunpack.c.l.b16 %v1525
          %v2039 = vunpack.c.l.b16 %v1526
          %v2040 = vunpack.c.l.b16 %v1527
          %v2041 = vunpack.c.l.b16 %v1528
          %v2042 = vunpack.c.l.b16 %v1529
          %v2043 = vunpack.c.l.b16 %v1530
          %v2044 = vunpack.c.l.b16 %v1531
          %v2045 = vunpack.c.l.b16 %v1532
          %v2046 = vunpack.c.l.b16 %v1533
          %v2047 = vunpack.c.l.b16 %v1534
          %v2048 = vunpack.c.l.b16 %v1535
          %v2049 = vunpack.c.l.b16 %v1536
          %v2050 = vunpack.c.l.b16 %v1537
          %v2051 = vunpack.c.l.b16 %v1538
          %v2052 = vunpack.c.l.b16 %v1539
          %v2053 = vunpack.c.l.b16 %v1540
          %v2054 = vunpack.c.l.b16 %v1541
          %v2055 = vunpack.c.l.b16 %v1542
          %v2056 = vunpack.c.l.b16 %v1543
          %v2057 = vunpack.c.l.b16 %v1544
          %v2058 = vunpack.c.l.b16 %v1545
          %v2059 = vunpack.c.l.b16 %v1546
          %v2060 = vunpack.c.l.b16 %v1547
          %v2061 = vunpack.c.l.b16 %v1548
          %v2062 = vunpack.c.l.b16 %v1549
          %v2063 = vunpack.c.l.b16 %v1550
          %v2064 = vunpack.c.l.b16 %v1551
          %v2065 = vunpack.c.l.b16 %v1552
          %v2066 = vunpack.c.l.b16 %v1553
          %v2067 = vunpack.c.l.b16 %v1554
          %v2068 = vunpack.c.l.b16 %v1555
          %v2069 = vunpack.c.l.b16 %v1556
          %v2070 = vunpack.c.l.b16 %v1557
          %v2071 = vunpack.c.l.b16 %v1558
          %v2072 = vunpack.c.l.b16 %v1559
          %v2073 = vunpack.c.l.b16 %v1560
          %v2074 = vunpack.c.l.b16 %v1561
          %v2075 = vunpack.c.l.b16 %v1562
          %v2076 = vunpack.c.l.b16 %v1563
          %v2077 = vunpack.c.l.b16 %v1564
          %v2078 = vunpack.c.l.b16 %v1565
          %v2079 = vunpack.c.l.b16 %v1566
          %v2080 = vunpack.c.l.b16 %v1567
          %v2081 = vunpack.c.l.b16 %v1568
          %v2082 = vunpack.c.l.b16 %v1569
          %v2083 = vunpack.c.l.b16 %v1570
          %v2084 = vunpack.c.l.b16 %v1571
          %v2085 = vunpack.c.l.b16 %v1572
          %v2086 = vunpack.c.l.b16 %v1573
          %v2087 = vunpack.c.l.b16 %v1574
          %v2088 = vunpack.c.l.b16 %v1575
          %v2089 = vunpack.c.l.b16 %v1576
          %v2090 = vunpack.c.l.b16 %v1577
          %v2091 = vunpack.c.l.b16 %v1578
          %v2092 = vunpack.c.l.b16 %v1579
          %v2093 = vunpack.c.l.b16 %v1580
          %v2094 = vunpack.c.l.b16 %v1581
          %v2095 = vunpack.c.l.b16 %v1582
          %v2096 = vunpack.c.l.b16 %v1583
          %v2097 = vunpack.c.l.b16 %v1584
          %v2098 = vunpack.c.l.b16 %v1585
          %v2099 = vunpack.c.l.b16 %v1586
          %v2100 = vunpack.c.l.b16 %v1587
          %v2101 = vunpack.c.l.b16 %v1588
          %v2102 = vunpack.c.l.b16 %v1589
          %v2103 = vunpack.c.l.b16 %v1590
          %v2104 = vunpack.c.l.b16 %v1591
          %v2105 = vunpack.c.l.b16 %v1592
          %v2106 = vunpack.c.l.b16 %v1593
          %v2107 = vunpack.c.l.b16 %v1594
          %v2108 = vunpack.c.l.b16 %v1595
          %v2109 = vunpack.c.l.b16 %v1596
          %v2110 = vunpack.c.l.b16 %v1597
          %v2111 = vunpack.c.l.b16 %v1598
          %v2112 = vunpack.c.l.b16 %v1599
          %v2113 = vunpack.c.l.b16 %v1600
          %v2114 = vunpack.c.l.b16 %v1601
          %v2115 = vunpack.c.l.b16 %v1602
          %v2116 = vunpack.c.l.b16 %v1603
          %v2117 = vunpack.c.l.b16 %v1604
          %v2118 = vunpack.c.l.b16 %v1605
          %v2119 = vunpack.c.l.b16 %v1606
          %v2120 = vunpack.c.l.b16 %v1607
          %v2121 = vunpack.c.l.b16 %v1608
          %v2122 = vunpack.c.l.b16 %v1609
          %v2123 = vunpack.c.l.b16 %v1610
          %v2124 = vunpack.c.l.b16 %v1611
          %v2125 = vunpack.c.l.b16 %v1612
          %v2126 = vunpack.c.l.b16 %v1613
          %v2127 = vunpack.c.l.b16 %v1614
          %v2128 = vunpack.c.l.b16 %v1615
          %v2129 = vunpack.c.l.b16 %v1616
          %v2130 = vunpack.c.l.b16 %v1617
          %v2131 = vunpack.c.l.b16 %v1618
          %v2132 = vunpack.c.l.b16 %v1619
          %v2133 = vunpack.c.l.b16 %v1620
          %v2134 = vunpack.c.l.b16 %v1621
          %v2135 = vunpack.c.l.b16 %v1622
          %v2136 = vunpack.c.l.b16 %v1623
          %v2137 = vunpack.c.l.b16 %v1624
          %v2138 = vunpack.c.l.b16 %v1625
          %v2139 = vunpack.c.l.b16 %v1626
          %v2140 = vunpack.c.l.b16 %v1627
          %v2141 = vunpack.c.l.b16 %v1628
          %v2142 = vunpack.c.l.b16 %v1629
          %v2143 = vunpack.c.l.b16 %v1630
          %v2144 = vunpack.c.l.b16 %v1631
          %v2145 = vunpack.c.l.b16 %v1632
          %v2146 = vunpack.c.l.b16 %v1633
          %v2147 = vunpack.c.l.b16 %v1634
          %v2148 = vunpack.c.l.b16 %v1635
          %v2149 = vunpack.c.l.b16 %v1636
          %v2150 = vunpack.c.l.b16 %v1637
          %v2151 = vunpack.c.l.b16 %v1638
          %v2152 = vunpack.c.l.b16 %v1639
          %v2153 = vunpack.c.l.b16 %v1640
          %v2154 = vunpack.c.l.b16 %v1641
          %v2155 = vunpack.c.l.b16 %v1642
          %v2156 = vunpack.c.l.b16 %v1643
          %v2157 = vunpack.c.l.b16 %v1644
          %v2158 = vunpack.c.l.b16 %v1645
          %v2159 = vunpack.c.l.b16 %v1646
          %v2160 = vunpack.c.l.b16 %v1647
          %v2161 = vunpack.c.l.b16 %v1648
          %v2162 = vunpack.c.l.b16 %v1649
          %v2163 = vunpack.c.l.b16 %v1650
          %v2164 = vunpack.c.l.b16 %v1651
          %v2165 = vunpack.c.l.b16 %v1652
          %v2166 = vunpack.c.l.b16 %v1653
          %v2167 = vunpack.c.l.b16 %v1654
          %v2168 = vunpack.c.l.b16 %v1655
          %v2169 = vunpack.c.l.b16 %v1656
          %v2170 = vunpack.c.l.b16 %v1657
          %v2171 = vunpack.c.l.b16 %v1658
          %v2172 = vunpack.c.l.b16 %v1659
          %v2173 = vunpack.c.l.b16 %v1660
          %v2174 = vunpack.c.l.b16 %v1661
          %v2175 = vunpack.c.l.b16 %v1662
          %v2176 = vunpack.c.l.b16 %v1663
          %v2177 = vunpack.c.l.b16 %v1664
          %v2178 = vunpack.c.l.b16 %v1665
          %v2179 = vunpack.c.l.b16 %v1666
          %v2180 = vunpack.c.l.b16 %v1667
          %v2181 = vunpack.c.l.b16 %v1668
          %v2182 = vunpack.c.l.b16 %v1669
          %v2183 = vunpack.c.l.b16 %v1670
          %v2184 = vunpack.c.l.b16 %v1671
          %v2185 = vunpack.c.l.b16 %v1672
          %v2186 = vunpack.c.l.b16 %v1673
          %v2187 = vunpack.c.l.b16 %v1674
          %v2188 = vunpack.c.l.b16 %v1675
          %v2189 = vunpack.c.l.b16 %v1676
          %v2190 = vunpack.c.l.b16 %v1677
          %v2191 = vunpack.c.l.b16 %v1678
          %v2192 = vunpack.c.l.b16 %v1679
          %v2193 = vunpack.c.l.b16 %v1680
          %v2194 = vunpack.c.l.b16 %v1681
          %v2195 = vunpack.c.l.b16 %v1682
          %v2196 = vunpack.c.l.b16 %v1683
          %v2197 = vunpack.c.l.b16 %v1684
          %v2198 = vunpack.c.l.b16 %v1685
          %v2199 = vunpack.c.l.b16 %v1686
          %v2200 = vunpack.c.l.b16 %v1687
          %v2201 = vunpack.c.l.b16 %v1688
          %v2202 = vunpack.c.l.b16 %v1689
          %v2203 = vunpack.c.l.b16 %v1690
          %v2204 = vunpack.c.l.b16 %v1691
          %v2205 = vunpack.c.l.b16 %v1692
          %v2206 = vunpack.c.l.b16 %v1693
          %v2207 = vunpack.c.l.b16 %v1694
          %v2208 = vunpack.c.l.b16 %v1695
          %v2209 = vunpack.c.l.b16 %v1696
          %v2210 = vunpack.c.l.b16 %v1697
          %v2211 = vunpack.c.l.b16 %v1698
          %v2212 = vunpack.c.l.b16 %v1699
          %v2213 = vunpack.c.l.b16 %v1700
          %v2214 = vunpack.c.l.b16 %v1701
          %v2215 = vunpack.c.l.b16 %v1702
          %v2216 = vunpack.c.l.b16 %v1703
          %v2217 = vunpack.c.l.b16 %v1704
          %v2218 = vunpack.c.l.b16 %v1705
          %v2219 = vunpack.c.l.b16 %v1706
          %v2220 = vunpack.c.l.b16 %v1707
          %v2221 = vunpack.c.l.b16 %v1708
          %v2222 = vunpack.c.l.b16 %v1709
          %v2223 = vunpack.c.l.b16 %v1710
          %v2224 = vunpack.c.l.b16 %v1711
          %v2225 = vunpack.c.l.b16 %v1712
          %v2226 = vunpack.c.l.b16 %v1713
          %v2227 = vunpack.c.l.b16 %v1714
          %v2228 = vunpack.c.l.b16 %v1715
          %v2229 = vunpack.c.l.b16 %v1716
          %v2230 = vunpack.c.l.b16 %v1717
          %v2231 = vunpack.c.l.b16 %v1718
          %v2232 = vunpack.c.l.b16 %v1719
          %v2233 = vunpack.c.l.b16 %v1720
          %v2234 = vunpack.c.l.b16 %v1721
          %v2235 = vunpack.c.l.b16 %v1722
          %v2236 = vunpack.c.l.b16 %v1723
          %v2237 = vunpack.c.l.b16 %v1724
          %v2238 = vunpack.c.l.b16 %v1725
          %v2239 = vunpack.c.l.b16 %v1726
          %v2240 = vunpack.c.l.b16 %v1727
          %v2241 = vunpack.c.l.b16 %v1728
          %v2242 = vunpack.c.l.b16 %v1729
          %v2243 = vunpack.c.l.b16 %v1730
          %v2244 = vunpack.c.l.b16 %v1731
          %v2245 = vunpack.c.l.b16 %v1732
          %v2246 = vunpack.c.l.b16 %v1733
          %v2247 = vunpack.c.l.b16 %v1734
          %v2248 = vunpack.c.l.b16 %v1735
          %v2249 = vunpack.c.l.b16 %v1736
          %v2250 = vunpack.c.l.b16 %v1737
          %v2251 = vunpack.c.l.b16 %v1738
          %v2252 = vunpack.c.l.b16 %v1739
          %v2253 = vunpack.c.l.b16 %v1740
          %v2254 = vunpack.c.l.b16 %v1741
          %v2255 = vunpack.c.l.b16 %v1742
          %v2256 = vunpack.c.l.b16 %v1743
          %v2257 = vunpack.c.l.b16 %v1744
          %v2258 = vunpack.c.l.b16 %v1745
          %v2259 = vunpack.c.l.b16 %v1746
          %v2260 = vunpack.c.l.b16 %v1747
          %v2261 = vunpack.c.l.b16 %v1748
          %v2262 = vunpack.c.l.b16 %v1749
          %v2263 = vunpack.c.l.b16 %v1750
          %v2264 = vunpack.c.l.b16 %v1751
          %v2265 = vunpack.c.l.b16 %v1752
          %v2266 = vunpack.c.l.b16 %v1753
          %v2267 = vunpack.c.l.b16 %v1754
          %v2268 = vunpack.c.l.b16 %v1755
          %v2269 = vunpack.c.l.b16 %v1756
          %v2270 = vunpack.c.l.b16 %v1757
          %v2271 = vunpack.c.l.b16 %v1758
          %v2272 = vunpack.c.l.b16 %v1759
          %v2273 = vunpack.c.l.b16 %v1760
          %v2274 = vunpack.c.l.b16 %v1761
          %v2275 = vunpack.c.l.b16 %v1762
          %v2276 = vunpack.c.l.b16 %v1763
          %v2277 = vunpack.c.l.b16 %v1764
          %v2278 = vunpack.c.l.b16 %v1765
          %v2279 = vunpack.c.l.b16 %v1766
          %v2280 = vunpack.c.l.b16 %v1767
          %v2281 = vunpack.c.l.b16 %v1768
          %v2282 = vunpack.c.l.b16 %v1769
          %v2283 = vunpack.c.l.b16 %v1770
          %v2284 = vunpack.c.l.b16 %v1771
          %v2285 = vunpack.c.l.b16 %v1772
          %v2286 = vunpack.c.l.b16 %v1773
          %v2287 = vunpack.c.l.b16 %v1774
          %v2288 = vpack.c.b16 %v2033, %v2032
          %v2289 = vpack.c.b16 %v2035, %v2034
          %v2290 = vpack.c.b16 %v2037, %v2036
          %v2291 = vpack.c.b16 %v2039, %v2038
          %v2292 = vpack.c.b16 %v2041, %v2040
          %v2293 = vpack.c.b16 %v2043, %v2042
          %v2294 = vpack.c.b16 %v2045, %v2044
          %v2295 = vpack.c.b16 %v2047, %v2046
          %v2296 = vpack.c.b16 %v2049, %v2048
          %v2297 = vpack.c.b16 %v2051, %v2050
          %v2298 = vpack.c.b16 %v2053, %v2052
          %v2299 = vpack.c.b16 %v2055, %v2054
          %v2300 = vpack.c.b16 %v2057, %v2056
          %v2301 = vpack.c.b16 %v2059, %v2058
          %v2302 = vpack.c.b16 %v2061, %v2060
          %v2303 = vpack.c.b16 %v2063, %v2062
          %v2304 = vpack.c.b16 %v2065, %v2064
          %v2305 = vpack.c.b16 %v2067, %v2066
          %v2306 = vpack.c.b16 %v2069, %v2068
          %v2307 = vpack.c.b16 %v2071, %v2070
          %v2308 = vpack.c.b16 %v2073, %v2072
          %v2309 = vpack.c.b16 %v2075, %v2074
          %v2310 = vpack.c.b16 %v2077, %v2076
          %v2311 = vpack.c.b16 %v2079, %v2078
          %v2312 = vpack.c.b16 %v2081, %v2080
          %v2313 = vpack.c.b16 %v2083, %v2082
          %v2314 = vpack.c.b16 %v2085, %v2084
          %v2315 = vpack.c.b16 %v2087, %v2086
          %v2316 = vpack.c.b16 %v2089, %v2088
          %v2317 = vpack.c.b16 %v2091, %v2090
          %v2318 = vpack.c.b16 %v2093, %v2092
          %v2319 = vpack.c.b16 %v2095, %v2094
          %v2320 = vpack.c.b16 %v2097, %v2096
          %v2321 = vpack.c.b16 %v2099, %v2098
          %v2322 = vpack.c.b16 %v2101, %v2100
          %v2323 = vpack.c.b16 %v2103, %v2102
          %v2324 = vpack.c.b16 %v2105, %v2104
          %v2325 = vpack.c.b16 %v2107, %v2106
          %v2326 = vpack.c.b16 %v2109, %v2108
          %v2327 = vpack.c.b16 %v2111, %v2110
          %v2328 = vpack.c.b16 %v2113, %v2112
          %v2329 = vpack.c.b16 %v2115, %v2114
          %v2330 = vpack.c.b16 %v2117, %v2116
          %v2331 = vpack.c.b16 %v2119, %v2118
          %v2332 = vpack.c.b16 %v2121, %v2120
          %v2333 = vpack.c.b16 %v2123, %v2122
          %v2334 = vpack.c.b16 %v2125, %v2124
          %v2335 = vpack.c.b16 %v2127, %v2126
          %v2336 = vpack.c.b16 %v2129, %v2128
          %v2337 = vpack.c.b16 %v2131, %v2130
          %v2338 = vpack.c.b16 %v2133, %v2132
          %v2339 = vpack.c.b16 %v2135, %v2134
          %v2340 = vpack.c.b16 %v2137, %v2136
          %v2341 = vpack.c.b16 %v2139, %v2138
          %v2342 = vpack.c.b16 %v2141, %v2140
          %v2343 = vpack.c.b16 %v2143, %v2142
          %v2344 = vpack.c.b16 %v2145, %v2144
          %v2345 = vpack.c.b16 %v2147, %v2146
          %v2346 = vpack.c.b16 %v2149, %v2148
          %v2347 = vpack.c.b16 %v2151, %v2150
          %v2348 = vpack.c.b16 %v2153, %v2152
          %v2349 = vpack.c.b16 %v2155, %v2154
          %v2350 = vpack.c.b16 %v2157, %v2156
          %v2351 = vpack.c.b16 %v2159, %v2158
          %v2352 = vpack.c.b16 %v2161, %v2160
          %v2353 = vpack.c.b16 %v2163, %v2162
          %v2354 = vpack.c.b16 %v2165, %v2164
          %v2355 = vpack.c.b16 %v2167, %v2166
          %v2356 = vpack.c.b16 %v2169, %v2168
          %v2357 = vpack.c.b16 %v2171, %v2170
          %v2358 = vpack.c.b16 %v2173, %v2172
          %v2359 = vpack.c.b16 %v2175, %v2174
          %v2360 = vpack.c.b16 %v2177, %v2176
          %v2361 = vpack.c.b16 %v2179, %v2178
          %v2362 = vpack.c.b16 %v2181, %v2180
          %v2363 = vpack.c.b16 %v2183, %v2182
          %v2364 = vpack.c.b16 %v2185, %v2184
          %v2365 = vpack.c.b16 %v2187, %v2186
          %v2366 = vpack.c.b16 %v2189, %v2188
          %v2367 = vpack.c.b16 %v2191, %v2190
          %v2368 = vpack.c.b16 %v2193, %v2192
          %v2369 = vpack.c.b16 %v2195, %v2194
          %v2370 = vpack.c.b16 %v2197, %v2196
          %v2371 = vpack.c.b16 %v2199, %v2198
          %v2372 = vpack.c.b16 %v2201, %v2200
          %v2373 = vpack.c.b16 %v2203, %v2202
          %v2374 = vpack.c.b16 %v2205, %v2204
          %v2375 = vpack.c.b16 %v2207, %v2206
          %v2376 = vpack.c.b16 %v2209, %v2208
          %v2377 = vpack.c.b16 %v2211, %v2210
          %v2378 = vpack.c.b16 %v2213, %v2212
          %v2379 = vpack.c.b16 %v2215, %v2214
          %v2380 = vpack.c.b16 %v2217, %v2216
          %v2381 = vpack.c.b16 %v2219, %v2218
          %v2382 = vpack.c.b16 %v2221, %v2220
          %v2383 = vpack.c.b16 %v2223, %v2222
          %v2384 = vpack.c.b16 %v2225, %v2224
          %v2385 = vpack.c.b16 %v2227, %v2226
          %v2386 = vpack.c.b16 %v2229, %v2228
          %v2387 = vpack.c.b16 %v2231, %v2230
          %v2388 = vpack.c.b16 %v2233, %v2232
          %v2389 = vpack.c.b16 %v2235, %v2234
          %v2390 = vpack.c.b16 %v2237, %v2236
          %v2391 = vpack.c.b16 %v2239, %v2238
          %v2392 = vpack.c.b16 %v2241, %v2240
          %v2393 = vpack.c.b16 %v2243, %v2242
          %v2394 = vpack.c.b16 %v2245, %v2244
          %v2395 = vpack.c.b16 %v2247, %v2246
          %v2396 = vpack.c.b16 %v2249, %v2248
          %v2397 = vpack.c.b16 %v2251, %v2250
          %v2398 = vpack.c.b16 %v2253, %v2252
          %v2399 = vpack.c.b16 %v2255, %v2254
          %v2400 = vpack.c.b16 %v2257, %v2256
          %v2401 = vpack.c.b16 %v2259, %v2258
          %v2402 = vpack.c.b16 %v2261, %v2260
          %v2403 = vpack.c.b16 %v2263, %v2262
          %v2404 = vpack.c.b16 %v2265, %v2264
          %v2405 = vpack.c.b16 %v2267, %v2266
          %v2406 = vpack.c.b16 %v2269, %v2268
          %v2407 = vpack.c.b16 %v2271, %v2270
          %v2408 = vpack.c.b16 %v2273, %v2272
          %v2409 = vpack.c.b16 %v2275, %v2274
          %v2410 = vpack.c.b16 %v2277, %v2276
          %v2411 = vpack.c.b16 %v2279, %v2278
          %v2412 = vpack.c.b16 %v2281, %v2280
          %v2413 = vpack.c.b16 %v2283, %v2282
          %v2414 = vpack.c.b16 %v2285, %v2284
          %v2415 = vpack.c.b16 %v2287, %v2286
          %2544 = vmatprep.subr.bf16.mxu0 0
          %2545 = vmatpush1.bf16.msra.mxu0 %v2295
          %2546 = vmatprep.subr.bf16.mxu0 0
          %2547 = vmatpush1.bf16.msra.mxu0 %v2294
          %2548 = vmatprep.subr.bf16.mxu0 0
          %2549 = vmatpush1.bf16.msra.mxu0 %v2293
          %2550 = vmatprep.subr.bf16.mxu0 0
          %2551 = vmatpush1.bf16.msra.mxu0 %v2292
          %2552 = vmatprep.subr.bf16.mxu0 0
          %2553 = vmatpush1.bf16.msra.mxu0 %v2291
          %2554 = vmatprep.subr.bf16.mxu0 0
          %2555 = vmatpush1.bf16.msra.mxu0 %v2290
          %2556 = vmatprep.subr.bf16.mxu0 0
          %2557 = vmatpush1.bf16.msra.mxu0 %v2289
          %2558 = vmatprep.subr.bf16.mxu0 0
          %2559 = vmatpush1.bf16.msra.mxu0 %v2288
          %2560 = vmatprep.subr.bf16.mxu0 0
          %2561 = vmatpush2.bf16.msra.mxu0 %v2303
          %2562 = vmatprep.subr.bf16.mxu0 0
          %2563 = vmatpush2.bf16.msra.mxu0 %v2302
          %2564 = vmatprep.subr.bf16.mxu0 0
          %2565 = vmatpush2.bf16.msra.mxu0 %v2301
          %2566 = vmatprep.subr.bf16.mxu0 0
          %2567 = vmatpush2.bf16.msra.mxu0 %v2300
          %2568 = vmatprep.subr.bf16.mxu0 0
          %2569 = vmatpush2.bf16.msra.mxu0 %v2299
          %2570 = vmatprep.subr.bf16.mxu0 0
          %2571 = vmatpush2.bf16.msra.mxu0 %v2298
          %2572 = vmatprep.subr.bf16.mxu0 0
          %2573 = vmatpush2.bf16.msra.mxu0 %v2297
          %2574 = vmatprep.subr.bf16.mxu0 0
          %2575 = vmatpush2.bf16.msra.mxu0 %v2296
          %2576 = vmatprep.mubr.bf16.mxu0 %v1504
          %2577 = vmatmul.mubr.bf16.gmra.mxu0 %v1503
          %v2578 = vpop.f32.mrf.mxu0
          %v2579 = vadd.f32 %v1775, %v2578
          %v2580 = vpop.f32.mrf.mxu0
          %v2581 = vpop.f32.mrf.mxu0
          %v2582 = vpop.f32.mrf.mxu0
          %2583 = vdwg.mxu0
          %2584 = vmatprep.subr.bf16.mxu0 0
          %2585 = vmatpush1.bf16.msra.mxu0 %v2311
          %2586 = vmatprep.subr.bf16.mxu0 0
          %2587 = vmatpush1.bf16.msra.mxu0 %v2310
          %2588 = vmatprep.subr.bf16.mxu0 0
          %2589 = vmatpush1.bf16.msra.mxu0 %v2309
          %2590 = vmatprep.subr.bf16.mxu0 0
          %2591 = vmatpush1.bf16.msra.mxu0 %v2308
          %2592 = vmatprep.subr.bf16.mxu0 0
          %2593 = vmatpush1.bf16.msra.mxu0 %v2307
          %2594 = vmatprep.subr.bf16.mxu0 0
          %2595 = vmatpush1.bf16.msra.mxu0 %v2306
          %2596 = vmatprep.subr.bf16.mxu0 0
          %2597 = vmatpush1.bf16.msra.mxu0 %v2305
          %2598 = vmatprep.subr.bf16.mxu0 0
          %2599 = vmatpush1.bf16.msra.mxu0 %v2304
          %2600 = vmatprep.subr.bf16.mxu0 0
          %2601 = vmatpush2.bf16.msra.mxu0 %v2319
          %2602 = vmatprep.subr.bf16.mxu0 0
          %2603 = vmatpush2.bf16.msra.mxu0 %v2318
          %2604 = vmatprep.subr.bf16.mxu0 0
          %2605 = vmatpush2.bf16.msra.mxu0 %v2317
          %2606 = vmatprep.subr.bf16.mxu0 0
          %2607 = vmatpush2.bf16.msra.mxu0 %v2316
          %2608 = vmatprep.subr.bf16.mxu0 0
          %2609 = vmatpush2.bf16.msra.mxu0 %v2315
          %2610 = vmatprep.subr.bf16.mxu0 0
          %2611 = vmatpush2.bf16.msra.mxu0 %v2314
          %2612 = vmatprep.subr.bf16.mxu0 0
          %2613 = vmatpush2.bf16.msra.mxu0 %v2313
          %2614 = vmatprep.subr.bf16.mxu0 0
          %2615 = vmatpush2.bf16.msra.mxu0 %v2312
          %2616 = vmatprep.mubr.bf16.mxu0 %v1506
          %2617 = vmatmul.mubr.bf16.gmra.mxu0 %v1505
          %v2618 = vpop.f32.mrf.mxu0
          %v2619 = vadd.f32 %v2579, %v2618
          %v2620 = vpop.f32.mrf.mxu0
          %v2621 = vpop.f32.mrf.mxu0
          %v2622 = vpop.f32.mrf.mxu0
          %2623 = vdwg.mxu0
          %2624 = vmatprep.subr.bf16.mxu0 0
          %2625 = vmatpush1.bf16.msra.mxu0 %v2327
          %2626 = vmatprep.subr.bf16.mxu0 0
          %2627 = vmatpush1.bf16.msra.mxu0 %v2326
          %2628 = vmatprep.subr.bf16.mxu0 0
          %2629 = vmatpush1.bf16.msra.mxu0 %v2325
          %2630 = vmatprep.subr.bf16.mxu0 0
          %2631 = vmatpush1.bf16.msra.mxu0 %v2324
          %2632 = vmatprep.subr.bf16.mxu0 0
          %2633 = vmatpush1.bf16.msra.mxu0 %v2323
          %2634 = vmatprep.subr.bf16.mxu0 0
          %2635 = vmatpush1.bf16.msra.mxu0 %v2322
          %2636 = vmatprep.subr.bf16.mxu0 0
          %2637 = vmatpush1.bf16.msra.mxu0 %v2321
          %2638 = vmatprep.subr.bf16.mxu0 0
          %2639 = vmatpush1.bf16.msra.mxu0 %v2320
          %2640 = vmatprep.subr.bf16.mxu0 0
          %2641 = vmatpush2.bf16.msra.mxu0 %v2335
          %2642 = vmatprep.subr.bf16.mxu0 0
          %2643 = vmatpush2.bf16.msra.mxu0 %v2334
          %2644 = vmatprep.subr.bf16.mxu0 0
          %2645 = vmatpush2.bf16.msra.mxu0 %v2333
          %2646 = vmatprep.subr.bf16.mxu0 0
          %2647 = vmatpush2.bf16.msra.mxu0 %v2332
          %2648 = vmatprep.subr.bf16.mxu0 0
          %2649 = vmatpush2.bf16.msra.mxu0 %v2331
          %2650 = vmatprep.subr.bf16.mxu0 0
          %2651 = vmatpush2.bf16.msra.mxu0 %v2330
          %2652 = vmatprep.subr.bf16.mxu0 0
          %2653 = vmatpush2.bf16.msra.mxu0 %v2329
          %2654 = vmatprep.subr.bf16.mxu0 0
          %2655 = vmatpush2.bf16.msra.mxu0 %v2328
          %2656 = vmatprep.mubr.bf16.mxu0 %v1508
          %2657 = vmatmul.mubr.bf16.gmra.mxu0 %v1507
          %v2658 = vpop.f32.mrf.mxu0
          %v2659 = vadd.f32 %v2619, %v2658
          %v2660 = vpop.f32.mrf.mxu0
          %v2661 = vpop.f32.mrf.mxu0
          %v2662 = vpop.f32.mrf.mxu0
          %2663 = vdwg.mxu0
          %2664 = vmatprep.subr.bf16.mxu0 0
          %2665 = vmatpush1.bf16.msra.mxu0 %v2343
          %2666 = vmatprep.subr.bf16.mxu0 0
          %2667 = vmatpush1.bf16.msra.mxu0 %v2342
          %2668 = vmatprep.subr.bf16.mxu0 0
          %2669 = vmatpush1.bf16.msra.mxu0 %v2341
          %2670 = vmatprep.subr.bf16.mxu0 0
          %2671 = vmatpush1.bf16.msra.mxu0 %v2340
          %2672 = vmatprep.subr.bf16.mxu0 0
          %2673 = vmatpush1.bf16.msra.mxu0 %v2339
          %2674 = vmatprep.subr.bf16.mxu0 0
          %2675 = vmatpush1.bf16.msra.mxu0 %v2338
          %2676 = vmatprep.subr.bf16.mxu0 0
          %2677 = vmatpush1.bf16.msra.mxu0 %v2337
          %2678 = vmatprep.subr.bf16.mxu0 0
          %2679 = vmatpush1.bf16.msra.mxu0 %v2336
          %2680 = vmatprep.subr.bf16.mxu0 0
          %2681 = vmatpush2.bf16.msra.mxu0 %v2351
          %2682 = vmatprep.subr.bf16.mxu0 0
          %2683 = vmatpush2.bf16.msra.mxu0 %v2350
          %2684 = vmatprep.subr.bf16.mxu0 0
          %2685 = vmatpush2.bf16.msra.mxu0 %v2349
          %2686 = vmatprep.subr.bf16.mxu0 0
          %2687 = vmatpush2.bf16.msra.mxu0 %v2348
          %2688 = vmatprep.subr.bf16.mxu0 0
          %2689 = vmatpush2.bf16.msra.mxu0 %v2347
          %2690 = vmatprep.subr.bf16.mxu0 0
          %2691 = vmatpush2.bf16.msra.mxu0 %v2346
          %2692 = vmatprep.subr.bf16.mxu0 0
          %2693 = vmatpush2.bf16.msra.mxu0 %v2345
          %2694 = vmatprep.subr.bf16.mxu0 0
          %2695 = vmatpush2.bf16.msra.mxu0 %v2344
          %2696 = vmatprep.mubr.bf16.mxu0 %v1510
          %2697 = vmatmul.mubr.bf16.gmra.mxu0 %v1509
          %v2698 = vpop.f32.mrf.mxu0
          %v2699 = vadd.f32 %v2659, %v2698
          %v2700 = vpop.f32.mrf.mxu0
          %v2701 = vpop.f32.mrf.mxu0
          %v2702 = vpop.f32.mrf.mxu0
          %2703 = vdwg.mxu0
          %2704 = vmatprep.subr.bf16.mxu0 0
          %2705 = vmatpush1.bf16.msra.mxu0 %v2359
          %2706 = vmatprep.subr.bf16.mxu0 0
          %2707 = vmatpush1.bf16.msra.mxu0 %v2358
          %2708 = vmatprep.subr.bf16.mxu0 0
          %2709 = vmatpush1.bf16.msra.mxu0 %v2357
          %2710 = vmatprep.subr.bf16.mxu0 0
          %2711 = vmatpush1.bf16.msra.mxu0 %v2356
          %2712 = vmatprep.subr.bf16.mxu0 0
          %2713 = vmatpush1.bf16.msra.mxu0 %v2355
          %2714 = vmatprep.subr.bf16.mxu0 0
          %2715 = vmatpush1.bf16.msra.mxu0 %v2354
          %2716 = vmatprep.subr.bf16.mxu0 0
          %2717 = vmatpush1.bf16.msra.mxu0 %v2353
          %2718 = vmatprep.subr.bf16.mxu0 0
          %2719 = vmatpush1.bf16.msra.mxu0 %v2352
          %2720 = vmatprep.subr.bf16.mxu0 0
          %2721 = vmatpush2.bf16.msra.mxu0 %v2367
          %2722 = vmatprep.subr.bf16.mxu0 0
          %2723 = vmatpush2.bf16.msra.mxu0 %v2366
          %2724 = vmatprep.subr.bf16.mxu0 0
          %2725 = vmatpush2.bf16.msra.mxu0 %v2365
          %2726 = vmatprep.subr.bf16.mxu0 0
          %2727 = vmatpush2.bf16.msra.mxu0 %v2364
          %2728 = vmatprep.subr.bf16.mxu0 0
          %2729 = vmatpush2.bf16.msra.mxu0 %v2363
          %2730 = vmatprep.subr.bf16.mxu0 0
          %2731 = vmatpush2.bf16.msra.mxu0 %v2362
          %2732 = vmatprep.subr.bf16.mxu0 0
          %2733 = vmatpush2.bf16.msra.mxu0 %v2361
          %2734 = vmatprep.subr.bf16.mxu0 0
          %2735 = vmatpush2.bf16.msra.mxu0 %v2360
          %2736 = vmatprep.mubr.bf16.mxu0 %v1512
          %2737 = vmatmul.mubr.bf16.gmra.mxu0 %v1511
          %v2738 = vpop.f32.mrf.mxu0
          %v2739 = vadd.f32 %v2699, %v2738
          %v2740 = vpop.f32.mrf.mxu0
          %v2741 = vpop.f32.mrf.mxu0
          %v2742 = vpop.f32.mrf.mxu0
          %2743 = vdwg.mxu0
          %2744 = vmatprep.subr.bf16.mxu0 0
          %2745 = vmatpush1.bf16.msra.mxu0 %v2375
          %2746 = vmatprep.subr.bf16.mxu0 0
          %2747 = vmatpush1.bf16.msra.mxu0 %v2374
          %2748 = vmatprep.subr.bf16.mxu0 0
          %2749 = vmatpush1.bf16.msra.mxu0 %v2373
          %2750 = vmatprep.subr.bf16.mxu0 0
          %2751 = vmatpush1.bf16.msra.mxu0 %v2372
          %2752 = vmatprep.subr.bf16.mxu0 0
          %2753 = vmatpush1.bf16.msra.mxu0 %v2371
          %2754 = vmatprep.subr.bf16.mxu0 0
          %2755 = vmatpush1.bf16.msra.mxu0 %v2370
          %2756 = vmatprep.subr.bf16.mxu0 0
          %2757 = vmatpush1.bf16.msra.mxu0 %v2369
          %2758 = vmatprep.subr.bf16.mxu0 0
          %2759 = vmatpush1.bf16.msra.mxu0 %v2368
          %2760 = vmatprep.subr.bf16.mxu0 0
          %2761 = vmatpush2.bf16.msra.mxu0 %v2383
          %2762 = vmatprep.subr.bf16.mxu0 0
          %2763 = vmatpush2.bf16.msra.mxu0 %v2382
          %2764 = vmatprep.subr.bf16.mxu0 0
          %2765 = vmatpush2.bf16.msra.mxu0 %v2381
          %2766 = vmatprep.subr.bf16.mxu0 0
          %2767 = vmatpush2.bf16.msra.mxu0 %v2380
          %2768 = vmatprep.subr.bf16.mxu0 0
          %2769 = vmatpush2.bf16.msra.mxu0 %v2379
          %2770 = vmatprep.subr.bf16.mxu0 0
          %2771 = vmatpush2.bf16.msra.mxu0 %v2378
          %2772 = vmatprep.subr.bf16.mxu0 0
          %2773 = vmatpush2.bf16.msra.mxu0 %v2377
          %2774 = vmatprep.subr.bf16.mxu0 0
          %2775 = vmatpush2.bf16.msra.mxu0 %v2376
          %2776 = vmatprep.mubr.bf16.mxu0 %v1514
          %2777 = vmatmul.mubr.bf16.gmra.mxu0 %v1513
          %v2778 = vpop.f32.mrf.mxu0
          %v2779 = vadd.f32 %v2739, %v2778
          %v2780 = vpop.f32.mrf.mxu0
          %v2781 = vpop.f32.mrf.mxu0
          %v2782 = vpop.f32.mrf.mxu0
          %2783 = vdwg.mxu0
          %2784 = vmatprep.subr.bf16.mxu0 0
          %2785 = vmatpush1.bf16.msra.mxu0 %v2391
          %2786 = vmatprep.subr.bf16.mxu0 0
          %2787 = vmatpush1.bf16.msra.mxu0 %v2390
          %2788 = vmatprep.subr.bf16.mxu0 0
          %2789 = vmatpush1.bf16.msra.mxu0 %v2389
          %2790 = vmatprep.subr.bf16.mxu0 0
          %2791 = vmatpush1.bf16.msra.mxu0 %v2388
          %2792 = vmatprep.subr.bf16.mxu0 0
          %2793 = vmatpush1.bf16.msra.mxu0 %v2387
          %2794 = vmatprep.subr.bf16.mxu0 0
          %2795 = vmatpush1.bf16.msra.mxu0 %v2386
          %2796 = vmatprep.subr.bf16.mxu0 0
          %2797 = vmatpush1.bf16.msra.mxu0 %v2385
          %2798 = vmatprep.subr.bf16.mxu0 0
          %2799 = vmatpush1.bf16.msra.mxu0 %v2384
          %2800 = vmatprep.subr.bf16.mxu0 0
          %2801 = vmatpush2.bf16.msra.mxu0 %v2399
          %2802 = vmatprep.subr.bf16.mxu0 0
          %2803 = vmatpush2.bf16.msra.mxu0 %v2398
          %2804 = vmatprep.subr.bf16.mxu0 0
          %2805 = vmatpush2.bf16.msra.mxu0 %v2397
          %2806 = vmatprep.subr.bf16.mxu0 0
          %2807 = vmatpush2.bf16.msra.mxu0 %v2396
          %2808 = vmatprep.subr.bf16.mxu0 0
          %2809 = vmatpush2.bf16.msra.mxu0 %v2395
          %2810 = vmatprep.subr.bf16.mxu0 0
          %2811 = vmatpush2.bf16.msra.mxu0 %v2394
          %2812 = vmatprep.subr.bf16.mxu0 0
          %2813 = vmatpush2.bf16.msra.mxu0 %v2393
          %2814 = vmatprep.subr.bf16.mxu0 0
          %2815 = vmatpush2.bf16.msra.mxu0 %v2392
          %2816 = vmatprep.mubr.bf16.mxu0 %v1516
          %2817 = vmatmul.mubr.bf16.gmra.mxu0 %v1515
          %v2818 = vpop.f32.mrf.mxu0
          %v2819 = vadd.f32 %v2779, %v2818
          %v2820 = vpop.f32.mrf.mxu0
          %v2821 = vpop.f32.mrf.mxu0
          %v2822 = vpop.f32.mrf.mxu0
          %2823 = vdwg.mxu0
          %2824 = vmatprep.subr.bf16.mxu0 0
          %2825 = vmatpush1.bf16.msra.mxu0 %v2407
          %2826 = vmatprep.subr.bf16.mxu0 0
          %2827 = vmatpush1.bf16.msra.mxu0 %v2406
          %2828 = vmatprep.subr.bf16.mxu0 0
          %2829 = vmatpush1.bf16.msra.mxu0 %v2405
          %2830 = vmatprep.subr.bf16.mxu0 0
          %2831 = vmatpush1.bf16.msra.mxu0 %v2404
          %2832 = vmatprep.subr.bf16.mxu0 0
          %2833 = vmatpush1.bf16.msra.mxu0 %v2403
          %2834 = vmatprep.subr.bf16.mxu0 0
          %2835 = vmatpush1.bf16.msra.mxu0 %v2402
          %2836 = vmatprep.subr.bf16.mxu0 0
          %2837 = vmatpush1.bf16.msra.mxu0 %v2401
          %2838 = vmatprep.subr.bf16.mxu0 0
          %2839 = vmatpush1.bf16.msra.mxu0 %v2400
          %2840 = vmatprep.subr.bf16.mxu0 0
          %2841 = vmatpush2.bf16.msra.mxu0 %v2415
          %2842 = vmatprep.subr.bf16.mxu0 0
          %2843 = vmatpush2.bf16.msra.mxu0 %v2414
          %2844 = vmatprep.subr.bf16.mxu0 0
          %2845 = vmatpush2.bf16.msra.mxu0 %v2413
          %2846 = vmatprep.subr.bf16.mxu0 0
          %2847 = vmatpush2.bf16.msra.mxu0 %v2412
          %2848 = vmatprep.subr.bf16.mxu0 0
          %2849 = vmatpush2.bf16.msra.mxu0 %v2411
          %2850 = vmatprep.subr.bf16.mxu0 0
          %2851 = vmatpush2.bf16.msra.mxu0 %v2410
          %2852 = vmatprep.subr.bf16.mxu0 0
          %2853 = vmatpush2.bf16.msra.mxu0 %v2409
          %2854 = vmatprep.subr.bf16.mxu0 0
          %2855 = vmatpush2.bf16.msra.mxu0 %v2408
          %2856 = vmatprep.mubr.bf16.mxu0 %v1518
          %2857 = vmatmul.mubr.bf16.gmra.mxu0 %v1517
          %v2858 = vpop.f32.mrf.mxu0
          %v2859 = vadd.f32 %v2819, %v2858
          %v2860 = vpop.f32.mrf.mxu0
          %v2861 = vpop.f32.mrf.mxu0
          %v2862 = vpop.f32.mrf.mxu0
          %2863 = vdwg.mxu0
          %2864 = vst [vmem:[%s239] sm:$0x1] %v2859
        $region48: #{firstnet_forward.1} parent=39 // pred_fallthru
          _
        %s2865 = sand.u32 %s151, 1
        %s2866 = scalar_lea.sflag [#allocation4], %s2865
        %s2867 = sand.u32 %s151, 1
        %s2868 = scalar_lea.vmem [#allocation3], %s2867
        // Predicated region
        $region49: #{firstnet_forward.1} parent=39 // pred_check
          %p2869 = pneg %p161
        $region50: #{firstnet_forward.1} parent=39 // pred_check_branch
          %2871 = sbr.rel (%p2869) target = $region52
        $region51: #{firstnet_forward.1} parent=39 // pred_region
          %s2873 = ssub.s32 16, 16
          %2874 = vsyncadd %s2866, %s2873
          %s2875 = smul.addr %s23, 16
          %s2876 = scalar_lea.hbm %s5, %s2875
          %s2878 = sshll.u32 %s2868, 4
          %s2879 = int_to_ptr.vmem [resolvable:$true] %s2878
          %2881 = dma.vmem_to_hbm [thread:$0]  %s2879, 16, %s2876, %s2866
        $region52: #{firstnet_forward.1} parent=39 // pred_fallthru
          _
      $region40: #{firstnet_forward.1} parent=5 // pred_fallthru
        _
      %p2882 = scmp.le.s32.totalorder 2, %s14
      // Predicated region
      $region53: #{firstnet_forward.1} parent=5 // pred_check
        %p2883 = pneg %p2882
      $region54: #{firstnet_forward.1} parent=5 // pred_check_branch
        %2885 = sbr.rel (%p2883) target = $region56
      $region55: #{firstnet_forward.1} parent=5 // pred_region
        %s2886 = ssub.s32 %s14, 2
        // Predicated region
        $region57: #{firstnet_forward.1} parent=55 // pred_check
          %p2887 = pneg %p167
        $region58: #{firstnet_forward.1} parent=55 // pred_check_branch
          %2889 = sbr.rel (%p2887) target = $region60
        $region59: #{firstnet_forward.1} parent=55 // pred_region
          %s2890 = sand.u32 %s152, 1
          %s2891 = scalar_lea.sflag [#allocation4], %s2890
          %s2892 = sand.u32 %s152, 1
          %s2893 = scalar_lea.vmem [#allocation3], %s2892
          %2894 = dma.done %s2891, 16
        $region60: #{firstnet_forward.1} parent=55 // pred_fallthru
          _
      $region56: #{firstnet_forward.1} parent=5 // pred_fallthru
        _
    $region6: #{firstnet_forward.1} parent=1 // loop_footer
      %s18 = sadd.s32 1, %s14
    $region7: #{firstnet_forward.1} parent=1 // loop_footer_branch
      %13 = sbr.rel target = $region3
    $region8: #{firstnet_forward.1} parent=1 // loop_exit
      _
    %2895 = vsyncpa [#allocation4], 1
    %s2896 = scalar_lea.sflag [#allocation4], 1
    %2897 = vsyncpa %s2896, 1

</llo_original>
